<compile_context>
chip_gen: v6e
topology: v6e:2x2x1
jax: 0.10.0
libtpu: 0.0.40
codegen_flags: <defaults>
</compile_context>

<pallas_src>
import functools

import jax
import jax.numpy as jnp
from jax.experimental import pallas as pl
from jax.experimental.pallas import tpu as pltpu

_LANE = 128
_MXU_TILE = 128          # conservative output-tile width (v5e); v6e/v7x are 256


# ---------------------------------------------------------------------------
# Small helpers
# ---------------------------------------------------------------------------

def _round_up(x, m):
    return ((x + m - 1) // m) * m


def _pad_last(arr, width):
    pad = width - arr.shape[-1]
    if pad == 0:
        return arr
    return jnp.pad(arr, [(0, 0)] * (arr.ndim - 1) + [(0, pad)])


def _choose_row_tile(num_nodes):
    """Largest row tile (multiple of 16 for bf16 sublane packing) whose
    double-buffered bf16 A row slab stays under ~24 MiB (v7x has 64 MiB VMEM)."""
    n16 = _round_up(max(int(num_nodes), 1), 16)
    budget = 24 * 1024 * 1024
    for tm in (512, 256, 128, 64, 32, 16):
        if tm <= n16 and 2 * tm * _round_up(n16, tm) * 2 <= budget:
            return tm
    return 16


def _vmem_limit(tm, n_pad, f_in, f_out, fc_out=0):
    """Scoped-VMEM request derived from the actual buffers (x2 double buffering,
    slack for Mosaic temporaries), clamped to v7x's 64 MiB physical VMEM."""
    a_bytes = 2 * tm * n_pad * 2                        # bf16 A row slab
    d_bytes = 2 * (tm + n_pad) * _LANE * 4              # (.,1) vectors pad to 128 lanes
    h_bytes = 2 * n_pad * f_in * 4                      # full resident H
    w_bytes = 2 * (f_in * f_out + 8 * f_out) * 4
    fc_bytes = 2 * (f_out * fc_out + 8 * fc_out) * 4
    out_bytes = 2 * tm * (f_out + fc_out) * 4
    tmp_bytes = (n_pad + tm) * (f_in + f_out + fc_out) * 4
    total = a_bytes + d_bytes + h_bytes + w_bytes + fc_bytes + out_bytes + tmp_bytes
    return int(min(max(2 * total, 8 * 1024 * 1024), 64 * 1024 * 1024))


# ---------------------------------------------------------------------------
# Kernels
# ---------------------------------------------------------------------------

def _aggregate(a, hs, w_ref, prefer_hw_first):
    """row-tile(A) @ (D^-1/2 H) @ W with the N^2 contraction at the narrower
    width.  `a` is the bf16 0/1 (A+I) row slab; `hs` is the f32 column-scaled H.
    bf16 MXU operands on the big contraction, f32 accumulation everywhere."""
    if prefer_hw_first:                                   # A @ (H @ W)
        hw = jnp.dot(hs, w_ref[...], preferred_element_type=jnp.float32)
        return jnp.dot(a, hw.astype(jnp.bfloat16),
                       preferred_element_type=jnp.float32)
    ah = jnp.dot(a, hs.astype(jnp.bfloat16),              # (A @ H) @ W
                 preferred_element_type=jnp.float32)
    return jnp.dot(ah, w_ref[...], preferred_element_type=jnp.float32)


def _make_gcn_layer_kernel(f_in, f_out):
    """relu(D^-1/2 (A+I) D^-1/2 @ H @ W + b) for one row tile per grid step."""
    # Association heuristic (review): compare MXU output-tile counts, tie -> A@(HW).
    prefer_hw_first = pl.cdiv(f_out, _MXU_TILE) <= pl.cdiv(f_in, _MXU_TILE)

    def kernel(a_ref, drow_ref, dcol_ref, h_ref, w_ref, b_ref, o_ref):
        hs = h_ref[...] * dcol_ref[...]                   # column scale, f32 VPU
        agg = _aggregate(a_ref[...], hs, w_ref, prefer_hw_first)
        y = agg * drow_ref[...] + b_ref[...]              # row scale + bias, f32
        o_ref[...] = jnp.maximum(y, 0.0).astype(o_ref.dtype)

    return kernel


def _make_gcn_fc_kernel(f_in, f_out):
    """Last GCN layer fused with the fc head (both per-row, so row tiling is safe)."""
    prefer_hw_first = pl.cdiv(f_out, _MXU_TILE) <= pl.cdiv(f_in, _MXU_TILE)

    def kernel(a_ref, drow_ref, dcol_ref, h_ref, w_ref, b_ref,
               wfc_ref, bfc_ref, emb_ref, out_ref):
        hs = h_ref[...] * dcol_ref[...]
        agg = _aggregate(a_ref[...], hs, w_ref, prefer_hw_first)
        emb = jnp.maximum(agg * drow_ref[...] + b_ref[...], 0.0)
        emb_ref[...] = emb.astype(emb_ref.dtype)          # logical-width store
        logits = jnp.dot(emb, wfc_ref[...],
                         preferred_element_type=jnp.float32) + bfc_ref[...]
        out_ref[...] = logits.astype(out_ref.dtype)       # 128-lane-dense store

    return kernel


# ---------------------------------------------------------------------------
# pallas_call builders (row-tiled, parallel grid)
# ---------------------------------------------------------------------------

def _gcn_layer_call(a_hat, d2, h, w, b, tm):
    n_pad = a_hat.shape[0]
    f_in, f_out = w.shape
    num_tiles = n_pad // tm
    row = lambda i: (i, 0)
    full = lambda i: (0, 0)
    flops = 2 * n_pad * n_pad * f_out + 2 * num_tiles * n_pad * f_in * f_out
    bytes_acc = (a_hat.size * 2 + h.size * 4 + (w.size + b.size) * 4
                 + 2 * n_pad * 4 + n_pad * f_out * 4)
    return pl.pallas_call(
        _make_gcn_layer_kernel(f_in, f_out),
        out_shape=jax.ShapeDtypeStruct((n_pad, f_out), jnp.float32),
        grid=(num_tiles,),
        in_specs=[
            pl.BlockSpec((tm, n_pad), row),       # bf16 A row slab (streamed)
            pl.BlockSpec((tm, 1), row),           # d^-1/2 for these rows
            pl.BlockSpec((n_pad, 1), full),       # d^-1/2 for all columns
            pl.BlockSpec((n_pad, f_in), full),    # full H (resident across tiles)
            pl.BlockSpec((f_in, f_out), full),    # W
            pl.BlockSpec((1, f_out), full),       # b
        ],
        out_specs=pl.BlockSpec((tm, f_out), row),
        compiler_params=pltpu.CompilerParams(
            dimension_semantics=("parallel",),
            vmem_limit_bytes=_vmem_limit(tm, n_pad, f_in, f_out)),
        cost_estimate=pl.CostEstimate(flops=int(flops), transcendentals=0,
                                      bytes_accessed=int(bytes_acc)),
    )(a_hat, d2, d2, h, w, b)


def _gcn_fc_call(a_hat, d2, h, w, b, w_fc, b_fc, tm):
    n_pad = a_hat.shape[0]
    f_in, f_out = w.shape
    out_pad = w_fc.shape[1]
    num_tiles = n_pad // tm
    row = lambda i: (i, 0)
    full = lambda i: (0, 0)
    flops = (2 * n_pad * n_pad * f_out + 2 * num_tiles * n_pad * f_in * f_out
             + 2 * n_pad * f_out * out_pad)
    bytes_acc = (a_hat.size * 2 + h.size * 4
                 + (w.size + b.size + w_fc.size + b_fc.size) * 4
                 + 2 * n_pad * 4 + n_pad * (f_out + out_pad) * 4)
    return pl.pallas_call(
        _make_gcn_fc_kernel(f_in, f_out),
        out_shape=(jax.ShapeDtypeStruct((n_pad, f_out), jnp.float32),
                   jax.ShapeDtypeStruct((n_pad, out_pad), jnp.float32)),
        grid=(num_tiles,),
        in_specs=[
            pl.BlockSpec((tm, n_pad), row),
            pl.BlockSpec((tm, 1), row),
            pl.BlockSpec((n_pad, 1), full),
            pl.BlockSpec((n_pad, f_in), full),
            pl.BlockSpec((f_in, f_out), full),
            pl.BlockSpec((1, f_out), full),
            pl.BlockSpec((f_out, out_pad), full),
            pl.BlockSpec((1, out_pad), full),
        ],
        out_specs=(pl.BlockSpec((tm, f_out), row),
                   pl.BlockSpec((tm, out_pad), row)),
        compiler_params=pltpu.CompilerParams(
            dimension_semantics=("parallel",),
            vmem_limit_bytes=_vmem_limit(tm, n_pad, f_in, f_out, fc_out=out_pad)),
        cost_estimate=pl.CostEstimate(flops=int(flops), transcendentals=0,
                                      bytes_accessed=int(bytes_acc)),
    )(a_hat, d2, d2, h, w, b, w_fc, b_fc)


# ---------------------------------------------------------------------------
# Graph preprocessing (run ONCE per graph, outside the steady-state jit)
# ---------------------------------------------------------------------------

def prepare_graph(edge_index, num_nodes):
    """Dense 0/1 (A + I) adjacency in bf16 (exact) + f32 D^-1/2, padded to a
    multiple of the row tile.  PyG GCNConv semantics: row = target, col = source,
    self loops added only where missing."""
    tm = _choose_row_tile(num_nodes)
    n_pad = _round_up(num_nodes, tm)
    src, dst = edge_index[0], edge_index[1]
    a = jnp.zeros((num_nodes, num_nodes), jnp.float32)
    a = a.at[dst, src].set(1.0)
    a = jnp.maximum(a, jnp.eye(num_nodes, dtype=jnp.float32))
    deg = a.sum(axis=1)
    d_inv_sqrt = jnp.where(deg > 0.0, jax.lax.rsqrt(deg), 0.0)
    a_pad = jnp.zeros((n_pad, n_pad), jnp.bfloat16)
    a_pad = a_pad.at[:num_nodes, :num_nodes].set(a.astype(jnp.bfloat16))
    d_pad = jnp.zeros((n_pad,), jnp.float32).at[:num_nodes].set(d_inv_sqrt)
    return a_pad, d_pad, tm


def normalized_adjacency(edge_index, num_nodes):
    """f32 normalized adjacency, used only by the pure-JAX reference."""
    src, dst = edge_index[0], edge_index[1]
    a = jnp.zeros((num_nodes, num_nodes), jnp.float32)
    a = a.at[dst, src].set(1.0)
    a = jnp.maximum(a, jnp.eye(num_nodes, dtype=jnp.float32))
    deg = a.sum(axis=1)
    d = jnp.where(deg > 0, 1.0 / jnp.sqrt(deg), 0.0)
    return a * d[:, None] * d[None, :]


# ---------------------------------------------------------------------------
# Model: parameters + forward
# ---------------------------------------------------------------------------

def init_params(key, in_dim, out_dim, hidden_dim=(64, 32)):
    dims = [in_dim] + list(hidden_dim)
    params = {"gcn": [], "fc": None}
    for i in range(len(dims) - 1):
        key, kw = jax.random.split(key)
        fan_in, fan_out = dims[i], dims[i + 1]
        w = jax.random.normal(kw, (fan_in, fan_out), jnp.float32) * jnp.sqrt(
            2.0 / (fan_in + fan_out))
        b = jnp.zeros((1, fan_out), jnp.float32)
        params["gcn"].append((w, b))
    key, kw = jax.random.split(key)
    w_fc = jax.random.normal(kw, (dims[-1], out_dim), jnp.float32) * jnp.sqrt(
        2.0 / (dims[-1] + out_dim))
    b_fc = jnp.zeros((1, out_dim), jnp.float32)
    params["fc"] = (w_fc, b_fc)
    return params


def gcn_extract_forward(params, x, a_hat, d_inv_sqrt, *, row_tile):
    """Steady-state forward.  `a_hat` (bf16 0/1, padded) and `d_inv_sqrt` (f32)
    come from prepare_graph().  Returns (embedding, logits) like the module."""
    n = x.shape[0]
    n_pad = a_hat.shape[0]
    assert n_pad % row_tile == 0 and n <= n_pad

    gcn_params = list(params["gcn"])
    w_fc, b_fc = params["fc"]
    out_dim = w_fc.shape[1]
    emb_dim = gcn_params[-1][0].shape[1]

    d2 = d_inv_sqrt.reshape(n_pad, 1).astype(jnp.float32)

    # Layer-1 input: pad rows to n_pad and feature dim to 128 lanes
    # (padded rows/cols provably stay zero through the network).
    f0 = _round_up(x.shape[1], _LANE)
    h = jnp.zeros((n_pad, f0), jnp.float32).at[:n, :x.shape[1]].set(
        x.astype(jnp.float32))

    # Hidden GCN layers: zero-pad K to the running width and the output width
    # to a 128-lane multiple so intermediate activations store/load lane-dense.
    for w, b in gcn_params[:-1]:
        f_in = h.shape[1]
        f_out = _round_up(w.shape[1], _LANE)
        w_p = jnp.zeros((f_in, f_out), jnp.float32).at[
            :w.shape[0], :w.shape[1]].set(w)
        b_p = _pad_last(b, f_out)
        h = _gcn_layer_call(a_hat, d2, h, w_p, b_p, row_tile)

    # Last GCN layer fused with the fc head: emb at logical width, logits padded.
    w_l, b_l = gcn_params[-1]
    f_in = h.shape[1]
    w_lp = jnp.zeros((f_in, emb_dim), jnp.float32).at[:w_l.shape[0], :].set(w_l)
    out_pad = _round_up(out_dim, _LANE)
    w_fcp = jnp.zeros((emb_dim, out_pad), jnp.float32).at[:, :out_dim].set(w_fc)
    b_fcp = _pad_last(b_fc, out_pad)
    emb, logits = _gcn_fc_call(a_hat, d2, h, w_lp, b_l, w_fcp, b_fcp, row_tile)

    return emb[:n, :], logits[:n, :out_dim]


def gcn_extract_reference(params, x, edge_index):
    """Pure-JAX f32 reference for correctness checking."""
    a_hat = normalized_adjacency(edge_index, x.shape[0])
    h = x
    for (w, b) in params["gcn"]:
        h = jnp.maximum(a_hat @ (h @ w) + b, 0.0)
    w_fc, b_fc = params["fc"]
    return h, h @ w_fc + b_fc


# ---------------------------------------------------------------------------
if __name__ == "__main__":
    key = jax.random.PRNGKey(0)

    num_nodes = 200                 # small, but > one row tile -> real 2-tile grid
    in_dim = 8
    out_dim = 16
    hidden_dim = (64, 32)

    key, kx = jax.random.split(key)
    x = jax.random.normal(kx, (num_nodes, in_dim), jnp.float32)

    # deterministic ring graph (both directions), edge_index shape [2, E]
    src = jnp.arange(num_nodes, dtype=jnp.int32)
    dst = (src + 1) % num_nodes
    edge_index = jnp.stack(
        [jnp.concatenate([src, dst]), jnp.concatenate([dst, src])], axis=0)

    params = init_params(key, in_dim, out_dim, hidden_dim)

    # Graph preprocessing (N^2 scatter + degree) runs once, outside the jit.
    a_hat, d_inv_sqrt, row_tile = prepare_graph(edge_index, num_nodes)
    jax.block_until_ready((a_hat, d_inv_sqrt))

    fwd = jax.jit(functools.partial(gcn_extract_forward, row_tile=row_tile))
    embedding, logits = fwd(params, x, a_hat, d_inv_sqrt)
    jax.block_until_ready((embedding, logits))

    assert embedding.shape == (num_nodes, hidden_dim[-1])
    assert logits.shape == (num_nodes, out_dim)

    emb_ref, logits_ref = gcn_extract_reference(params, x, edge_index)
    # bf16 operands feed the N^2 MXU contraction -> compare at bf16-level tolerance.
    assert jnp.allclose(embedding, emb_ref, atol=2e-2, rtol=2e-2), float(
        jnp.max(jnp.abs(embedding - emb_ref)))
    assert jnp.allclose(logits, logits_ref, atol=2e-2, rtol=2e-2), float(
        jnp.max(jnp.abs(logits - logits_ref)))

    print("KERNEL_OK")
</pallas_src>

<mosaic_0001>
module attributes {stable_mosaic.version = 11 : i64} {
  func.func @kernel(%arg0: i32, %arg1: memref<128x256xbf16, #tpu.memory_space<vmem>>, %arg2: memref<128x1xf32, #tpu.memory_space<vmem>>, %arg3: memref<256x1xf32, #tpu.memory_space<vmem>>, %arg4: memref<256x128xf32, #tpu.memory_space<vmem>>, %arg5: memref<128x128xf32, #tpu.memory_space<vmem>>, %arg6: memref<1x128xf32, #tpu.memory_space<vmem>>, %arg7: memref<128x128xf32, #tpu.memory_space<vmem>>) attributes {dimension_semantics = [#tpu.dimension_semantics<parallel>], iteration_bounds = array<i64: 2>, scalar_prefetch = 0 : i64, scratch_operands = 0 : i64, tpu.core_type = #tpu.core_type<tc>, window_params = [{transform_indices = @transform_0, window_bounds = array<i64: 128, 256>}, {transform_indices = @transform_1, window_bounds = array<i64: 128, 1>}, {pipeline_mode = #tpu.pipeline_mode<synchronous>, transform_indices = @transform_2, window_bounds = array<i64: 256, 1>}, {pipeline_mode = #tpu.pipeline_mode<synchronous>, transform_indices = @transform_3, window_bounds = array<i64: 256, 128>}, {pipeline_mode = #tpu.pipeline_mode<synchronous>, transform_indices = @transform_4, window_bounds = array<i64: 128, 128>}, {pipeline_mode = #tpu.pipeline_mode<synchronous>, transform_indices = @transform_5, window_bounds = array<i64: 1, 128>}, {transform_indices = @transform_6, window_bounds = array<i64: 128, 128>}]} {
    %c0 = arith.constant 0 : index
    %c0_0 = arith.constant 0 : index
    %0 = vector.load %arg4[%c0, %c0_0] : memref<256x128xf32, #tpu.memory_space<vmem>>, vector<256x128xf32>
    %c0_1 = arith.constant 0 : index
    %c0_2 = arith.constant 0 : index
    %1 = vector.load %arg3[%c0_1, %c0_2] : memref<256x1xf32, #tpu.memory_space<vmem>>, vector<256x1xf32>
    %2 = vector.broadcast %1 : vector<256x1xf32> to vector<256x128xf32>
    %3 = arith.mulf %0, %2 : vector<256x128xf32>
    %c0_3 = arith.constant 0 : index
    %c0_4 = arith.constant 0 : index
    %4 = vector.load %arg1[%c0_3, %c0_4] : memref<128x256xbf16, #tpu.memory_space<vmem>>, vector<128x256xbf16>
    %c0_5 = arith.constant 0 : index
    %c0_6 = arith.constant 0 : index
    %5 = vector.load %arg5[%c0_5, %c0_6] : memref<128x128xf32, #tpu.memory_space<vmem>>, vector<128x128xf32>
    %cst = arith.constant dense<0.000000e+00> : vector<256x128xf32>
    %6 = tpu.matmul %3, %5, %cst {dimension_numbers = #tpu.dot_dimension_numbers<[1], [0], [0], [1], [0, 0, 1, 1], [], []>} : vector<256x128xf32>, vector<128x128xf32>, vector<256x128xf32> -> vector<256x128xf32>
    %7 = arith.truncf %6 : vector<256x128xf32> to vector<256x128xbf16>
    %cst_7 = arith.constant dense<0.000000e+00> : vector<128x128xf32>
    %8 = tpu.matmul %4, %7, %cst_7 {dimension_numbers = #tpu.dot_dimension_numbers<[1], [0], [0], [1], [0, 0, 1, 1], [], []>} : vector<128x256xbf16>, vector<256x128xbf16>, vector<128x128xf32> -> vector<128x128xf32>
    %c0_8 = arith.constant 0 : index
    %c0_9 = arith.constant 0 : index
    %9 = vector.load %arg2[%c0_8, %c0_9] : memref<128x1xf32, #tpu.memory_space<vmem>>, vector<128x1xf32>
    %10 = vector.broadcast %9 : vector<128x1xf32> to vector<128x128xf32>
    %11 = arith.mulf %8, %10 : vector<128x128xf32>
    %c0_10 = arith.constant 0 : index
    %c0_11 = arith.constant 0 : index
    %12 = vector.load %arg6[%c0_10, %c0_11] : memref<1x128xf32, #tpu.memory_space<vmem>>, vector<1x128xf32>
    %13 = vector.broadcast %12 : vector<1x128xf32> to vector<128x128xf32>
    %14 = arith.addf %11, %13 : vector<128x128xf32>
    %cst_12 = arith.constant 0.000000e+00 : f32
    %15 = vector.broadcast %cst_12 : f32 to vector<128x128xf32>
    %16 = arith.maximumf %14, %15 : vector<128x128xf32>
    %c0_13 = arith.constant 0 : index
    %c0_14 = arith.constant 0 : index
    %17 = vector.load %arg7[%c0_13, %c0_14] : memref<128x128xf32, #tpu.memory_space<vmem>>, vector<128x128xf32>
    tpu.vector_store %arg7[%c0_13, %c0_14], %16 {strides = array<i32>} : memref<128x128xf32, #tpu.memory_space<vmem>>, vector<128x128xf32>,
    return
  }
  func.func @transform_0(%arg0: i32) -> (i32, i32) {
    %c0_i32 = arith.constant 0 : i32
    %c0_i32_0 = arith.constant 0 : i32
    return %arg0, %c0_i32 : i32, i32
  }
  func.func @transform_1(%arg0: i32) -> (i32, i32) {
    %c0_i32 = arith.constant 0 : i32
    %c0_i32_0 = arith.constant 0 : i32
    return %arg0, %c0_i32 : i32, i32
  }
  func.func @transform_2(%arg0: i32) -> (i32, i32) {
    %c0_i32 = arith.constant 0 : i32
    %c0_i32_0 = arith.constant 0 : i32
    %c0_i32_1 = arith.constant 0 : i32
    return %c0_i32, %c0_i32_0 : i32, i32
  }
  func.func @transform_3(%arg0: i32) -> (i32, i32) {
    %c0_i32 = arith.constant 0 : i32
    %c0_i32_0 = arith.constant 0 : i32
    %c0_i32_1 = arith.constant 0 : i32
    return %c0_i32, %c0_i32_0 : i32, i32
  }
  func.func @transform_4(%arg0: i32) -> (i32, i32) {
    %c0_i32 = arith.constant 0 : i32
    %c0_i32_0 = arith.constant 0 : i32
    %c0_i32_1 = arith.constant 0 : i32
    return %c0_i32, %c0_i32_0 : i32, i32
  }
  func.func @transform_5(%arg0: i32) -> (i32, i32) {
    %c0_i32 = arith.constant 0 : i32
    %c0_i32_0 = arith.constant 0 : i32
    %c0_i32_1 = arith.constant 0 : i32
    return %c0_i32, %c0_i32_0 : i32, i32
  }
  func.func @transform_6(%arg0: i32) -> (i32, i32) {
    %c0_i32 = arith.constant 0 : i32
    %c0_i32_0 = arith.constant 0 : i32
    return %arg0, %c0_i32 : i32, i32
  }
}

module attributes {stable_mosaic.version = 11 : i64} {
  func.func @kernel(%arg0: i32, %arg1: memref<128x256xbf16, #tpu.memory_space<vmem>>, %arg2: memref<128x1xf32, #tpu.memory_space<vmem>>, %arg3: memref<256x1xf32, #tpu.memory_space<vmem>>, %arg4: memref<256x128xf32, #tpu.memory_space<vmem>>, %arg5: memref<128x32xf32, #tpu.memory_space<vmem>>, %arg6: memref<1x32xf32, #tpu.memory_space<vmem>>, %arg7: memref<32x128xf32, #tpu.memory_space<vmem>>, %arg8: memref<1x128xf32, #tpu.memory_space<vmem>>, %arg9: memref<128x32xf32, #tpu.memory_space<vmem>>, %arg10: memref<128x128xf32, #tpu.memory_space<vmem>>) attributes {dimension_semantics = [#tpu.dimension_semantics<parallel>], iteration_bounds = array<i64: 2>, scalar_prefetch = 0 : i64, scratch_operands = 0 : i64, tpu.core_type = #tpu.core_type<tc>, window_params = [{transform_indices = @transform_0, window_bounds = array<i64: 128, 256>}, {transform_indices = @transform_1, window_bounds = array<i64: 128, 1>}, {pipeline_mode = #tpu.pipeline_mode<synchronous>, transform_indices = @transform_2, window_bounds = array<i64: 256, 1>}, {pipeline_mode = #tpu.pipeline_mode<synchronous>, transform_indices = @transform_3, window_bounds = array<i64: 256, 128>}, {pipeline_mode = #tpu.pipeline_mode<synchronous>, transform_indices = @transform_4, window_bounds = array<i64: 128, 32>}, {pipeline_mode = #tpu.pipeline_mode<synchronous>, transform_indices = @transform_5, window_bounds = array<i64: 1, 32>}, {pipeline_mode = #tpu.pipeline_mode<synchronous>, transform_indices = @transform_6, window_bounds = array<i64: 32, 128>}, {pipeline_mode = #tpu.pipeline_mode<synchronous>, transform_indices = @transform_7, window_bounds = array<i64: 1, 128>}, {transform_indices = @transform_8, window_bounds = array<i64: 128, 32>}, {transform_indices = @transform_9, window_bounds = array<i64: 128, 128>}]} {
    %c0 = arith.constant 0 : index
    %c0_0 = arith.constant 0 : index
    %0 = vector.load %arg4[%c0, %c0_0] : memref<256x128xf32, #tpu.memory_space<vmem>>, vector<256x128xf32>
    %c0_1 = arith.constant 0 : index
    %c0_2 = arith.constant 0 : index
    %1 = vector.load %arg3[%c0_1, %c0_2] : memref<256x1xf32, #tpu.memory_space<vmem>>, vector<256x1xf32>
    %2 = vector.broadcast %1 : vector<256x1xf32> to vector<256x128xf32>
    %3 = arith.mulf %0, %2 : vector<256x128xf32>
    %c0_3 = arith.constant 0 : index
    %c0_4 = arith.constant 0 : index
    %4 = vector.load %arg1[%c0_3, %c0_4] : memref<128x256xbf16, #tpu.memory_space<vmem>>, vector<128x256xbf16>
    %c0_5 = arith.constant 0 : index
    %c0_6 = arith.constant 0 : index
    %5 = vector.load %arg5[%c0_5, %c0_6] : memref<128x32xf32, #tpu.memory_space<vmem>>, vector<128x32xf32>
    %cst = arith.constant dense<0.000000e+00> : vector<256x32xf32>
    %6 = tpu.matmul %3, %5, %cst {dimension_numbers = #tpu.dot_dimension_numbers<[1], [0], [0], [1], [0, 0, 1, 1], [], []>} : vector<256x128xf32>, vector<128x32xf32>, vector<256x32xf32> -> vector<256x32xf32>
    %7 = arith.truncf %6 : vector<256x32xf32> to vector<256x32xbf16>
    %cst_7 = arith.constant dense<0.000000e+00> : vector<128x32xf32>
    %8 = tpu.matmul %4, %7, %cst_7 {dimension_numbers = #tpu.dot_dimension_numbers<[1], [0], [0], [1], [0, 0, 1, 1], [], []>} : vector<128x256xbf16>, vector<256x32xbf16>, vector<128x32xf32> -> vector<128x32xf32>
    %c0_8 = arith.constant 0 : index
    %c0_9 = arith.constant 0 : index
    %9 = vector.load %arg2[%c0_8, %c0_9] : memref<128x1xf32, #tpu.memory_space<vmem>>, vector<128x1xf32>
    %10 = vector.broadcast %9 : vector<128x1xf32> to vector<128x32xf32>
    %11 = arith.mulf %8, %10 : vector<128x32xf32>
    %c0_10 = arith.constant 0 : index
    %c0_11 = arith.constant 0 : index
    %12 = vector.load %arg6[%c0_10, %c0_11] : memref<1x32xf32, #tpu.memory_space<vmem>>, vector<1x32xf32>
    %13 = vector.broadcast %12 : vector<1x32xf32> to vector<128x32xf32>
    %14 = arith.addf %11, %13 : vector<128x32xf32>
    %cst_12 = arith.constant 0.000000e+00 : f32
    %15 = vector.broadcast %cst_12 : f32 to vector<128x32xf32>
    %16 = arith.maximumf %14, %15 : vector<128x32xf32>
    %c0_13 = arith.constant 0 : index
    %c0_14 = arith.constant 0 : index
    %17 = vector.load %arg9[%c0_13, %c0_14] : memref<128x32xf32, #tpu.memory_space<vmem>>, vector<128x32xf32>
    tpu.vector_store %arg9[%c0_13, %c0_14], %16 {strides = array<i32>} : memref<128x32xf32, #tpu.memory_space<vmem>>, vector<128x32xf32>,
    %c0_15 = arith.constant 0 : index
    %c0_16 = arith.constant 0 : index
    %18 = vector.load %arg7[%c0_15, %c0_16] : memref<32x128xf32, #tpu.memory_space<vmem>>, vector<32x128xf32>
    %cst_17 = arith.constant dense<0.000000e+00> : vector<128x128xf32>
    %19 = tpu.matmul %16, %18, %cst_17 {dimension_numbers = #tpu.dot_dimension_numbers<[1], [0], [0], [1], [0, 0, 1, 1], [], []>} : vector<128x32xf32>, vector<32x128xf32>, vector<128x128xf32> -> vector<128x128xf32>
    %c0_18 = arith.constant 0 : index
    %c0_19 = arith.constant 0 : index
    %20 = vector.load %arg8[%c0_18, %c0_19] : memref<1x128xf32, #tpu.memory_space<vmem>>, vector<1x128xf32>
    %21 = vector.broadcast %20 : vector<1x128xf32> to vector<128x128xf32>
    %22 = arith.addf %19, %21 : vector<128x128xf32>
    %c0_20 = arith.constant 0 : index
    %c0_21 = arith.constant 0 : index
    %23 = vector.load %arg10[%c0_20, %c0_21] : memref<128x128xf32, #tpu.memory_space<vmem>>, vector<128x128xf32>
    tpu.vector_store %arg10[%c0_20, %c0_21], %22 {strides = array<i32>} : memref<128x128xf32, #tpu.memory_space<vmem>>, vector<128x128xf32>,
    return
  }
  func.func @transform_0(%arg0: i32) -> (i32, i32) {
    %c0_i32 = arith.constant 0 : i32
    %c0_i32_0 = arith.constant 0 : i32
    return %arg0, %c0_i32 : i32, i32
  }
  func.func @transform_1(%arg0: i32) -> (i32, i32) {
    %c0_i32 = arith.constant 0 : i32
    %c0_i32_0 = arith.constant 0 : i32
    return %arg0, %c0_i32 : i32, i32
  }
  func.func @transform_2(%arg0: i32) -> (i32, i32) {
    %c0_i32 = arith.constant 0 : i32
    %c0_i32_0 = arith.constant 0 : i32
    %c0_i32_1 = arith.constant 0 : i32
    return %c0_i32, %c0_i32_0 : i32, i32
  }
  func.func @transform_3(%arg0: i32) -> (i32, i32) {
    %c0_i32 = arith.constant 0 : i32
    %c0_i32_0 = arith.constant 0 : i32
    %c0_i32_1 = arith.constant 0 : i32
    return %c0_i32, %c0_i32_0 : i32, i32
  }
  func.func @transform_4(%arg0: i32) -> (i32, i32) {
    %c0_i32 = arith.constant 0 : i32
    %c0_i32_0 = arith.constant 0 : i32
    %c0_i32_1 = arith.constant 0 : i32
    return %c0_i32, %c0_i32_0 : i32, i32
  }
  func.func @transform_5(%arg0: i32) -> (i32, i32) {
    %c0_i32 = arith.constant 0 : i32
    %c0_i32_0 = arith.constant 0 : i32
    %c0_i32_1 = arith.constant 0 : i32
    return %c0_i32, %c0_i32_0 : i32, i32
  }
  func.func @transform_6(%arg0: i32) -> (i32, i32) {
    %c0_i32 = arith.constant 0 : i32
    %c0_i32_0 = arith.constant 0 : i32
    %c0_i32_1 = arith.constant 0 : i32
    return %c0_i32, %c0_i32_0 : i32, i32
  }
  func.func @transform_7(%arg0: i32) -> (i32, i32) {
    %c0_i32 = arith.constant 0 : i32
    %c0_i32_0 = arith.constant 0 : i32
    %c0_i32_1 = arith.constant 0 : i32
    return %c0_i32, %c0_i32_0 : i32, i32
  }
  func.func @transform_8(%arg0: i32) -> (i32, i32) {
    %c0_i32 = arith.constant 0 : i32
    %c0_i32_0 = arith.constant 0 : i32
    return %arg0, %c0_i32 : i32, i32
  }
  func.func @transform_9(%arg0: i32) -> (i32, i32) {
    %c0_i32 = arith.constant 0 : i32
    %c0_i32_0 = arith.constant 0 : i32
    return %arg0, %c0_i32 : i32, i32
  }
}

</mosaic_0001>

<llo_original>
// kernel: gcn_extract_forward.2
$region0: #{gcn_extract_forward.2}
  #allocation0 [shape = 'u32[]', space=smem, size = 0x4, offset = 0x4, fixed_abs, tag = 'smem constant byte address 0x4 - core index']
  #allocation1 [shape = 'u32[144,128]{1,0:T(1,128)}', space=vmem, size = 0x12000, scoped, tag = 'internal scratch']
  %s0 = inlined_call_operand.vmem [shape: bf16[256,256], index: 0, kind: input, shape index: {}]
  %s1 = inlined_call_operand.vmem [shape: f32[256,1], index: 1, kind: input, shape index: {}, may-alias: {1,2}]
  %s2 = inlined_call_operand.vmem [shape: f32[256,1], index: 2, kind: input, shape index: {}, may-alias: {1,2}]
  %s3 = inlined_call_operand.vmem [shape: f32[256,128], index: 3, kind: input, shape index: {}]
  %s4 = inlined_call_operand.vmem [shape: f32[128,128], index: 4, kind: input, shape index: {}]
  %s5 = inlined_call_operand.vmem [shape: f32[1,128], index: 5, kind: input, shape index: {}]
  %s6 = inlined_call_operand.vmem [shape: f32[256,128], index: 6, kind: output, shape index: {}]
  %s7 = sld [smem:[#allocation0]]
  $region57: #{gcn_extract_forward.2} parent=0
    _
  %s9 = ssub.s32 1, %s7
  %s10 = scalar_select 0, %s9, %s7
  loop: start=0, step=1, limit=4
  $region2: #{gcn_extract_forward.2} parent=0 // loop_pre_header
    _
  $region3: #{gcn_extract_forward.2} parent=0 // loop_header
    %s12 = sphi 0, %s16
    %p13 = scmp.ge.s32.totalorder %s12, 4
    %s22 = sphi 0, %s24
    %s25 = sphi 0, %s22
    %s26 = sphi 0, %s25
    %s42 = sphi 0, %s26
    %s48 = sphi 0, %s50
    %s51 = sphi 0, %s48
    %s52 = sphi 0, %s51
    %s68 = sphi 0, %s52
    %s72 = sphi 0, %s72
    %s74 = sphi 0, %s72
    %s75 = sphi 0, %s74
    %s89 = sphi 0, %s75
    %s93 = sphi 0, %s93
    %s95 = sphi 0, %s93
    %s96 = sphi 0, %s95
    %s110 = sphi 0, %s96
    %s114 = sphi 0, %s114
    %s116 = sphi 0, %s114
    %s117 = sphi 0, %s116
    %s131 = sphi 0, %s117
    %s135 = sphi 0, %s135
    %s137 = sphi 0, %s135
    %s138 = sphi 0, %s137
    %s152 = sphi 0, %s138
    %s158 = sphi 0, %s160
    %s161 = sphi 0, %s158
    %s162 = sphi 0, %s161
    %s178 = sphi 0, %s162
  $region4: #{gcn_extract_forward.2} parent=0 // loop_header_branch
    %15 = sbr.rel (%p13) target = $region8
  $region5: #{gcn_extract_forward.2} parent=0 // loop_body
    %s17 = ssub.s32 %s12, 1
    %s18 = ssub.s32 %s12, 2
    %s19 = sadd.s32 %s12, 1
    %s20 = ssub.s32 %s12, %s19
    %p21 = scmp.eq.s32.totalorder %s20, 0
    %s23 = sadd.s32 %s22, 1
    %s24 = scalar_select %p21, %s22, %s23
    %p27 = pneg %p21
    %p28 = scmp.eq.s32.totalorder %s12, 1
    %p29 = por %p27, %p28
    %p30 = scmp.ne.s32.totalorder %s22, %s25
    %p31 = scmp.eq.s32.totalorder %s12, 0
    %p32 = por %p30, %p31
    %p33 = scmp.ne.s32.totalorder %s22, %s25
    %p34 = scmp.eq.s32.totalorder %s17, 1
    %p35 = por %p33, %p34
    %p36 = scmp.ne.s32.totalorder %s25, %s26
    %p37 = scmp.eq.s32.totalorder %s17, 0
    %p38 = por %p36, %p37
    %p39 = scmp.ne.s32.totalorder %s25, %s26
    %p40 = scmp.eq.s32.totalorder %s18, 1
    %p41 = por %p39, %p40
    %p43 = scmp.ne.s32.totalorder %s26, %s42
    %p44 = scmp.eq.s32.totalorder %s18, 0
    %p45 = por %p43, %p44
    %s46 = ssub.s32 %s12, %s19
    %p47 = scmp.eq.s32.totalorder %s46, 0
    %s49 = sadd.s32 %s48, 1
    %s50 = scalar_select %p47, %s48, %s49
    %p53 = pneg %p47
    %p54 = scmp.eq.s32.totalorder %s12, 1
    %p55 = por %p53, %p54
    %p56 = scmp.ne.s32.totalorder %s48, %s51
    %p57 = scmp.eq.s32.totalorder %s12, 0
    %p58 = por %p56, %p57
    %p59 = scmp.ne.s32.totalorder %s48, %s51
    %p60 = scmp.eq.s32.totalorder %s17, 1
    %p61 = por %p59, %p60
    %p62 = scmp.ne.s32.totalorder %s51, %s52
    %p63 = scmp.eq.s32.totalorder %s17, 0
    %p64 = por %p62, %p63
    %p65 = scmp.ne.s32.totalorder %s51, %s52
    %p66 = scmp.eq.s32.totalorder %s18, 1
    %p67 = por %p65, %p66
    %p69 = scmp.ne.s32.totalorder %s52, %s68
    %p70 = scmp.eq.s32.totalorder %s18, 0
    %p71 = por %p69, %p70
    %s73 = sadd.s32 %s72, 1
    %p76 = scmp.eq.s32.totalorder %s12, 1
    %p77 = scmp.ne.s32.totalorder %s72, %s74
    %p78 = scmp.eq.s32.totalorder %s12, 0
    %p79 = por %p77, %p78
    %p80 = scmp.ne.s32.totalorder %s72, %s74
    %p81 = scmp.eq.s32.totalorder %s17, 1
    %p82 = por %p80, %p81
    %p83 = scmp.ne.s32.totalorder %s74, %s75
    %p84 = scmp.eq.s32.totalorder %s17, 0
    %p85 = por %p83, %p84
    %p86 = scmp.ne.s32.totalorder %s74, %s75
    %p87 = scmp.eq.s32.totalorder %s18, 1
    %p88 = por %p86, %p87
    %p90 = scmp.ne.s32.totalorder %s75, %s89
    %p91 = scmp.eq.s32.totalorder %s18, 0
    %p92 = por %p90, %p91
    %s94 = sadd.s32 %s93, 1
    %p97 = scmp.eq.s32.totalorder %s12, 1
    %p98 = scmp.ne.s32.totalorder %s93, %s95
    %p99 = scmp.eq.s32.totalorder %s12, 0
    %p100 = por %p98, %p99
    %p101 = scmp.ne.s32.totalorder %s93, %s95
    %p102 = scmp.eq.s32.totalorder %s17, 1
    %p103 = por %p101, %p102
    %p104 = scmp.ne.s32.totalorder %s95, %s96
    %p105 = scmp.eq.s32.totalorder %s17, 0
    %p106 = por %p104, %p105
    %p107 = scmp.ne.s32.totalorder %s95, %s96
    %p108 = scmp.eq.s32.totalorder %s18, 1
    %p109 = por %p107, %p108
    %p111 = scmp.ne.s32.totalorder %s96, %s110
    %p112 = scmp.eq.s32.totalorder %s18, 0
    %p113 = por %p111, %p112
    %s115 = sadd.s32 %s114, 1
    %p118 = scmp.eq.s32.totalorder %s12, 1
    %p119 = scmp.ne.s32.totalorder %s114, %s116
    %p120 = scmp.eq.s32.totalorder %s12, 0
    %p121 = por %p119, %p120
    %p122 = scmp.ne.s32.totalorder %s114, %s116
    %p123 = scmp.eq.s32.totalorder %s17, 1
    %p124 = por %p122, %p123
    %p125 = scmp.ne.s32.totalorder %s116, %s117
    %p126 = scmp.eq.s32.totalorder %s17, 0
    %p127 = por %p125, %p126
    %p128 = scmp.ne.s32.totalorder %s116, %s117
    %p129 = scmp.eq.s32.totalorder %s18, 1
    %p130 = por %p128, %p129
    %p132 = scmp.ne.s32.totalorder %s117, %s131
    %p133 = scmp.eq.s32.totalorder %s18, 0
    %p134 = por %p132, %p133
    %s136 = sadd.s32 %s135, 1
    %p139 = scmp.eq.s32.totalorder %s12, 1
    %p140 = scmp.ne.s32.totalorder %s135, %s137
    %p141 = scmp.eq.s32.totalorder %s12, 0
    %p142 = por %p140, %p141
    %p143 = scmp.ne.s32.totalorder %s135, %s137
    %p144 = scmp.eq.s32.totalorder %s17, 1
    %p145 = por %p143, %p144
    %p146 = scmp.ne.s32.totalorder %s137, %s138
    %p147 = scmp.eq.s32.totalorder %s17, 0
    %p148 = por %p146, %p147
    %p149 = scmp.ne.s32.totalorder %s137, %s138
    %p150 = scmp.eq.s32.totalorder %s18, 1
    %p151 = por %p149, %p150
    %p153 = scmp.ne.s32.totalorder %s138, %s152
    %p154 = scmp.eq.s32.totalorder %s18, 0
    %p155 = por %p153, %p154
    %s156 = ssub.s32 %s12, %s19
    %p157 = scmp.eq.s32.totalorder %s156, 0
    %s159 = sadd.s32 %s158, 1
    %s160 = scalar_select %p157, %s158, %s159
    %p163 = pneg %p157
    %p164 = scmp.eq.s32.totalorder %s12, 1
    %p165 = por %p163, %p164
    %p166 = scmp.ne.s32.totalorder %s158, %s161
    %p167 = scmp.eq.s32.totalorder %s12, 0
    %p168 = por %p166, %p167
    %p169 = scmp.ne.s32.totalorder %s158, %s161
    %p170 = scmp.eq.s32.totalorder %s17, 1
    %p171 = por %p169, %p170
    %p172 = scmp.ne.s32.totalorder %s161, %s162
    %p173 = scmp.eq.s32.totalorder %s17, 0
    %p174 = por %p172, %p173
    %p175 = scmp.ne.s32.totalorder %s161, %s162
    %p176 = scmp.eq.s32.totalorder %s18, 1
    %p177 = por %p175, %p176
    %p179 = scmp.ne.s32.totalorder %s162, %s178
    %p180 = scmp.eq.s32.totalorder %s18, 0
    %p181 = por %p179, %p180
    %p182 = scmp.le.s32.totalorder 1, %s12
    %p183 = scmp.lt.s32.totalorder %s12, 3
    %p184 = pnand %p182, %p183
    %p185 = pneg %p184
    // Predicated region
    $region9: #{gcn_extract_forward.2} parent=5 // pred_check
      _
    $region10: #{gcn_extract_forward.2} parent=5 // pred_check_branch
      %187 = sbr.rel (%p184) target = $region12
    $region11: #{gcn_extract_forward.2} parent=5 // pred_region
      %s188 = ssub.s32 %s12, 1
      // Predicated region
      $region13: #{gcn_extract_forward.2} parent=11 // pred_check
        %p189 = pneg %p85
      $region14: #{gcn_extract_forward.2} parent=11 // pred_check_branch
        %191 = sbr.rel (%p189) target = $region16
      $region15: #{gcn_extract_forward.2} parent=11 // pred_region
        _
      $region16: #{gcn_extract_forward.2} parent=11 // pred_fallthru
        _
      // Predicated region
      $region17: #{gcn_extract_forward.2} parent=11 // pred_check
        %p192 = pneg %p106
      $region18: #{gcn_extract_forward.2} parent=11 // pred_check_branch
        %194 = sbr.rel (%p192) target = $region20
      $region19: #{gcn_extract_forward.2} parent=11 // pred_region
        _
      $region20: #{gcn_extract_forward.2} parent=11 // pred_fallthru
        _
      // Predicated region
      $region21: #{gcn_extract_forward.2} parent=11 // pred_check
        %p195 = pneg %p127
      $region22: #{gcn_extract_forward.2} parent=11 // pred_check_branch
        %197 = sbr.rel (%p195) target = $region24
      $region23: #{gcn_extract_forward.2} parent=11 // pred_region
        _
      $region24: #{gcn_extract_forward.2} parent=11 // pred_fallthru
        _
      // Predicated region
      $region25: #{gcn_extract_forward.2} parent=11 // pred_check
        %p198 = pneg %p148
      $region26: #{gcn_extract_forward.2} parent=11 // pred_check_branch
        %200 = sbr.rel (%p198) target = $region28
      $region27: #{gcn_extract_forward.2} parent=11 // pred_region
        _
      $region28: #{gcn_extract_forward.2} parent=11 // pred_fallthru
        _
    $region12: #{gcn_extract_forward.2} parent=5 // pred_fallthru
      _
    %p201 = scmp.lt.s32.totalorder %s12, 2
    // Predicated region
    $region29: #{gcn_extract_forward.2} parent=5 // pred_check
      %p202 = pneg %p201
    $region30: #{gcn_extract_forward.2} parent=5 // pred_check_branch
      %204 = sbr.rel (%p202) target = $region32
    $region31: #{gcn_extract_forward.2} parent=5 // pred_region
      // Predicated region
      $region33: #{gcn_extract_forward.2} parent=31 // pred_check
        %p205 = pneg %p32
      $region34: #{gcn_extract_forward.2} parent=31 // pred_check_branch
        %207 = sbr.rel (%p205) target = $region36
      $region35: #{gcn_extract_forward.2} parent=31 // pred_region
        %s208 = smul.u32 16, %s12
        %p209 = scmp.lt.s32.totalorder %s208, 31
        %s210 = scalar_select %p209, %s208, 31
        %s211 = smul.addr %s210, 2
        %s212 = smul.addr %s211, 4
        %s213 = scalar_lea.vmem %s0, %s212
        %s214 = smul.u32 16, %s12
      $region36: #{gcn_extract_forward.2} parent=31 // pred_fallthru
        _
      // Predicated region
      $region37: #{gcn_extract_forward.2} parent=31 // pred_check
        %p215 = pneg %p58
      $region38: #{gcn_extract_forward.2} parent=31 // pred_check_branch
        %217 = sbr.rel (%p215) target = $region40
      $region39: #{gcn_extract_forward.2} parent=31 // pred_region
        %s218 = smul.u32 16, %s12
        %p219 = scmp.lt.s32.totalorder %s218, 31
        %s220 = scalar_select %p219, %s218, 31
        %s221 = smul.addr %s220, 8
        %s222 = scalar_lea.vmem %s1, %s221
        %s223 = smul.u32 16, %s12
      $region40: #{gcn_extract_forward.2} parent=31 // pred_fallthru
        _
    $region32: #{gcn_extract_forward.2} parent=5 // pred_fallthru
      _
    %p224 = scmp.le.s32.totalorder 1, %s12
    %p225 = scmp.lt.s32.totalorder %s12, 3
    %p226 = pnand %p224, %p225
    %p227 = pneg %p226
    // Predicated region
    $region41: #{gcn_extract_forward.2} parent=5 // pred_check
      _
    $region42: #{gcn_extract_forward.2} parent=5 // pred_check_branch
      %229 = sbr.rel (%p226) target = $region44
    $region43: #{gcn_extract_forward.2} parent=5 // pred_region
      %s230 = ssub.s32 %s12, 1
      %s231 = smul.u32 16, %s17
      %p232 = scmp.lt.s32.totalorder %s231, 31
      %s233 = scalar_select %p232, %s231, 31
      %s234 = smul.addr %s233, 2
      %s235 = smul.addr %s234, 4
      %s236 = scalar_lea.vmem %s0, %s235
      %p237 = pneg %p38
      %p238 = pneg %p35
      %s239 = smul.u32 16, %s17
      %p240 = scmp.lt.s32.totalorder %s239, 31
      %s241 = scalar_select %p240, %s239, 31
      %s242 = smul.addr %s241, 8
      %s243 = scalar_lea.vmem %s1, %s242
      %p244 = pneg %p64
      %p245 = pneg %p61
      %p246 = pneg %p85
      %p247 = pneg %p82
      %p248 = pneg %p106
      %p249 = pneg %p103
      %p250 = pneg %p127
      %p251 = pneg %p124
      %p252 = pneg %p148
      %p253 = pneg %p145
      %p254 = pneg %p174
      %p255 = pneg %p171
      %s256 = smul.u32 16, %s17
      %p257 = scmp.lt.s32.totalorder %s256, 31
      %s258 = scalar_select %p257, %s256, 31
      %s259 = smul.addr %s258, 8
      %s260 = scalar_lea.vmem %s6, %s259
      %s261 = smul.u32 16, %s17
      %p262 = scmp.lt.s32.totalorder %s261, 31
      %s263 = scalar_select %p262, %s261, 31
      %s264 = smul.addr %s263, 2
      %s265 = smul.addr %s264, 4
      %s266 = scalar_lea.vmem %s0, %s265
      %s267 = smul.u32 16, %s17
      %s268 = smul.u32 16, %s17
      %p269 = scmp.lt.s32.totalorder %s268, 31
      %s270 = scalar_select %p269, %s268, 31
      %s271 = smul.addr %s270, 8
      %s272 = scalar_lea.vmem %s1, %s271
      %s273 = smul.u32 16, %s17
      %s274 = smul.u32 16, %s17
      %p275 = scmp.lt.s32.totalorder %s274, 31
      %s276 = scalar_select %p275, %s274, 31
      %s277 = smul.addr %s276, 8
      %s278 = scalar_lea.vmem %s6, %s277
      %s279 = smul.u32 16, %s17
      %v281 = vld [vmem:[%s3] sm:$0xff]
      %v282 = vld [vmem:[%s3 + $0x8] sm:$0xff]
      %v283 = vld [vmem:[%s3 + $0x10] sm:$0xff]
      %v284 = vld [vmem:[%s3 + $0x18] sm:$0xff]
      %v285 = vld [vmem:[%s3 + $0x20] sm:$0xff]
      %v286 = vld [vmem:[%s3 + $0x28] sm:$0xff]
      %v287 = vld [vmem:[%s3 + $0x30] sm:$0xff]
      %v288 = vld [vmem:[%s3 + $0x38] sm:$0xff]
      %v289 = vld [vmem:[%s3 + $0x40] sm:$0xff]
      %v290 = vld [vmem:[%s3 + $0x48] sm:$0xff]
      %v291 = vld [vmem:[%s3 + $0x50] sm:$0xff]
      %v292 = vld [vmem:[%s3 + $0x58] sm:$0xff]
      %v293 = vld [vmem:[%s3 + $0x60] sm:$0xff]
      %v294 = vld [vmem:[%s3 + $0x68] sm:$0xff]
      %v295 = vld [vmem:[%s3 + $0x70] sm:$0xff]
      %v296 = vld [vmem:[%s3 + $0x78] sm:$0xff]
      %v297 = vld [vmem:[%s3 + $0x80] sm:$0xff]
      %v298 = vld [vmem:[%s3 + $0x88] sm:$0xff]
      %v299 = vld [vmem:[%s3 + $0x90] sm:$0xff]
      %v300 = vld [vmem:[%s3 + $0x98] sm:$0xff]
      %v301 = vld [vmem:[%s3 + $0xa0] sm:$0xff]
      %v302 = vld [vmem:[%s3 + $0xa8] sm:$0xff]
      %v303 = vld [vmem:[%s3 + $0xb0] sm:$0xff]
      %v304 = vld [vmem:[%s3 + $0xb8] sm:$0xff]
      %v305 = vld [vmem:[%s3 + $0xc0] sm:$0xff]
      %v306 = vld [vmem:[%s3 + $0xc8] sm:$0xff]
      %v307 = vld [vmem:[%s3 + $0xd0] sm:$0xff]
      %v308 = vld [vmem:[%s3 + $0xd8] sm:$0xff]
      %v309 = vld [vmem:[%s3 + $0xe0] sm:$0xff]
      %v310 = vld [vmem:[%s3 + $0xe8] sm:$0xff]
      %v311 = vld [vmem:[%s3 + $0xf0] sm:$0xff]
      %v312 = vld [vmem:[%s3 + $0xf8] sm:$0xff]
      %v313 = vld [vmem:[%s2] sm:$0xff]
      %v314 = vld [vmem:[%s2 + $0x8] sm:$0xff]
      %v315 = vld [vmem:[%s2 + $0x10] sm:$0xff]
      %v316 = vld [vmem:[%s2 + $0x18] sm:$0xff]
      %v317 = vld [vmem:[%s2 + $0x20] sm:$0xff]
      %v318 = vld [vmem:[%s2 + $0x28] sm:$0xff]
      %v319 = vld [vmem:[%s2 + $0x30] sm:$0xff]
      %v320 = vld [vmem:[%s2 + $0x38] sm:$0xff]
      %v321 = vld [vmem:[%s2 + $0x40] sm:$0xff]
      %v322 = vld [vmem:[%s2 + $0x48] sm:$0xff]
      %v323 = vld [vmem:[%s2 + $0x50] sm:$0xff]
      %v324 = vld [vmem:[%s2 + $0x58] sm:$0xff]
      %v325 = vld [vmem:[%s2 + $0x60] sm:$0xff]
      %v326 = vld [vmem:[%s2 + $0x68] sm:$0xff]
      %v327 = vld [vmem:[%s2 + $0x70] sm:$0xff]
      %v328 = vld [vmem:[%s2 + $0x78] sm:$0xff]
      %v329 = vld [vmem:[%s2 + $0x80] sm:$0xff]
      %v330 = vld [vmem:[%s2 + $0x88] sm:$0xff]
      %v331 = vld [vmem:[%s2 + $0x90] sm:$0xff]
      %v332 = vld [vmem:[%s2 + $0x98] sm:$0xff]
      %v333 = vld [vmem:[%s2 + $0xa0] sm:$0xff]
      %v334 = vld [vmem:[%s2 + $0xa8] sm:$0xff]
      %v335 = vld [vmem:[%s2 + $0xb0] sm:$0xff]
      %v336 = vld [vmem:[%s2 + $0xb8] sm:$0xff]
      %v337 = vld [vmem:[%s2 + $0xc0] sm:$0xff]
      %v338 = vld [vmem:[%s2 + $0xc8] sm:$0xff]
      %v339 = vld [vmem:[%s2 + $0xd0] sm:$0xff]
      %v340 = vld [vmem:[%s2 + $0xd8] sm:$0xff]
      %v341 = vld [vmem:[%s2 + $0xe0] sm:$0xff]
      %v342 = vld [vmem:[%s2 + $0xe8] sm:$0xff]
      %v343 = vld [vmem:[%s2 + $0xf0] sm:$0xff]
      %v344 = vld [vmem:[%s2 + $0xf8] sm:$0xff]
      %346 = vset.pattern.permute.xlu0 0
      %347 = vperm.xlu0 %346, %v313
      %v348 = vpop.permute.xlu0 %347
      %351 = vset.pattern.permute.xlu0 0
      %352 = vperm.xlu0 %351, %v314
      %v353 = vpop.permute.xlu0 %352
      %356 = vset.pattern.permute.xlu0 0
      %357 = vperm.xlu0 %356, %v315
      %v358 = vpop.permute.xlu0 %357
      %361 = vset.pattern.permute.xlu0 0
      %362 = vperm.xlu0 %361, %v316
      %v363 = vpop.permute.xlu0 %362
      %366 = vset.pattern.permute.xlu0 0
      %367 = vperm.xlu0 %366, %v317
      %v368 = vpop.permute.xlu0 %367
      %371 = vset.pattern.permute.xlu0 0
      %372 = vperm.xlu0 %371, %v318
      %v373 = vpop.permute.xlu0 %372
      %376 = vset.pattern.permute.xlu0 0
      %377 = vperm.xlu0 %376, %v319
      %v378 = vpop.permute.xlu0 %377
      %381 = vset.pattern.permute.xlu0 0
      %382 = vperm.xlu0 %381, %v320
      %v383 = vpop.permute.xlu0 %382
      %386 = vset.pattern.permute.xlu0 0
      %387 = vperm.xlu0 %386, %v321
      %v388 = vpop.permute.xlu0 %387
      %391 = vset.pattern.permute.xlu0 0
      %392 = vperm.xlu0 %391, %v322
      %v393 = vpop.permute.xlu0 %392
      %396 = vset.pattern.permute.xlu0 0
      %397 = vperm.xlu0 %396, %v323
      %v398 = vpop.permute.xlu0 %397
      %401 = vset.pattern.permute.xlu0 0
      %402 = vperm.xlu0 %401, %v324
      %v403 = vpop.permute.xlu0 %402
      %406 = vset.pattern.permute.xlu0 0
      %407 = vperm.xlu0 %406, %v325
      %v408 = vpop.permute.xlu0 %407
      %411 = vset.pattern.permute.xlu0 0
      %412 = vperm.xlu0 %411, %v326
      %v413 = vpop.permute.xlu0 %412
      %416 = vset.pattern.permute.xlu0 0
      %417 = vperm.xlu0 %416, %v327
      %v418 = vpop.permute.xlu0 %417
      %421 = vset.pattern.permute.xlu0 0
      %422 = vperm.xlu0 %421, %v328
      %v423 = vpop.permute.xlu0 %422
      %426 = vset.pattern.permute.xlu0 0
      %427 = vperm.xlu0 %426, %v329
      %v428 = vpop.permute.xlu0 %427
      %431 = vset.pattern.permute.xlu0 0
      %432 = vperm.xlu0 %431, %v330
      %v433 = vpop.permute.xlu0 %432
      %436 = vset.pattern.permute.xlu0 0
      %437 = vperm.xlu0 %436, %v331
      %v438 = vpop.permute.xlu0 %437
      %441 = vset.pattern.permute.xlu0 0
      %442 = vperm.xlu0 %441, %v332
      %v443 = vpop.permute.xlu0 %442
      %446 = vset.pattern.permute.xlu0 0
      %447 = vperm.xlu0 %446, %v333
      %v448 = vpop.permute.xlu0 %447
      %451 = vset.pattern.permute.xlu0 0
      %452 = vperm.xlu0 %451, %v334
      %v453 = vpop.permute.xlu0 %452
      %456 = vset.pattern.permute.xlu0 0
      %457 = vperm.xlu0 %456, %v335
      %v458 = vpop.permute.xlu0 %457
      %461 = vset.pattern.permute.xlu0 0
      %462 = vperm.xlu0 %461, %v336
      %v463 = vpop.permute.xlu0 %462
      %466 = vset.pattern.permute.xlu0 0
      %467 = vperm.xlu0 %466, %v337
      %v468 = vpop.permute.xlu0 %467
      %471 = vset.pattern.permute.xlu0 0
      %472 = vperm.xlu0 %471, %v338
      %v473 = vpop.permute.xlu0 %472
      %476 = vset.pattern.permute.xlu0 0
      %477 = vperm.xlu0 %476, %v339
      %v478 = vpop.permute.xlu0 %477
      %481 = vset.pattern.permute.xlu0 0
      %482 = vperm.xlu0 %481, %v340
      %v483 = vpop.permute.xlu0 %482
      %486 = vset.pattern.permute.xlu0 0
      %487 = vperm.xlu0 %486, %v341
      %v488 = vpop.permute.xlu0 %487
      %491 = vset.pattern.permute.xlu0 0
      %492 = vperm.xlu0 %491, %v342
      %v493 = vpop.permute.xlu0 %492
      %496 = vset.pattern.permute.xlu0 0
      %497 = vperm.xlu0 %496, %v343
      %v498 = vpop.permute.xlu0 %497
      %501 = vset.pattern.permute.xlu0 0
      %502 = vperm.xlu0 %501, %v344
      %v503 = vpop.permute.xlu0 %502
      %v505 = vmul.f32 %v281, %v348
      %v506 = vmul.f32 %v282, %v353
      %v507 = vmul.f32 %v283, %v358
      %v508 = vmul.f32 %v284, %v363
      %v509 = vmul.f32 %v285, %v368
      %v510 = vmul.f32 %v286, %v373
      %v511 = vmul.f32 %v287, %v378
      %v512 = vmul.f32 %v288, %v383
      %v513 = vmul.f32 %v289, %v388
      %v514 = vmul.f32 %v290, %v393
      %v515 = vmul.f32 %v291, %v398
      %v516 = vmul.f32 %v292, %v403
      %v517 = vmul.f32 %v293, %v408
      %v518 = vmul.f32 %v294, %v413
      %v519 = vmul.f32 %v295, %v418
      %v520 = vmul.f32 %v296, %v423
      %v521 = vmul.f32 %v297, %v428
      %v522 = vmul.f32 %v298, %v433
      %v523 = vmul.f32 %v299, %v438
      %v524 = vmul.f32 %v300, %v443
      %v525 = vmul.f32 %v301, %v448
      %v526 = vmul.f32 %v302, %v453
      %v527 = vmul.f32 %v303, %v458
      %v528 = vmul.f32 %v304, %v463
      %v529 = vmul.f32 %v305, %v468
      %v530 = vmul.f32 %v306, %v473
      %v531 = vmul.f32 %v307, %v478
      %v532 = vmul.f32 %v308, %v483
      %v533 = vmul.f32 %v309, %v488
      %v534 = vmul.f32 %v310, %v493
      %v535 = vmul.f32 %v311, %v498
      %v536 = vmul.f32 %v312, %v503
      %v537 = vld [vmem:[%s266] sm:$0xff]
      %v538 = vld [vmem:[%s266 + $0x8] sm:$0xff]
      %v539 = vld [vmem:[%s266 + $0x10] sm:$0xff]
      %v540 = vld [vmem:[%s266 + $0x18] sm:$0xff]
      %v541 = vld [vmem:[%s266 + $0x20] sm:$0xff]
      %v542 = vld [vmem:[%s266 + $0x28] sm:$0xff]
      %v543 = vld [vmem:[%s266 + $0x30] sm:$0xff]
      %v544 = vld [vmem:[%s266 + $0x38] sm:$0xff]
      %v545 = vld [vmem:[%s266 + $0x40] sm:$0xff]
      %v546 = vld [vmem:[%s266 + $0x48] sm:$0xff]
      %v547 = vld [vmem:[%s266 + $0x50] sm:$0xff]
      %v548 = vld [vmem:[%s266 + $0x58] sm:$0xff]
      %v549 = vld [vmem:[%s266 + $0x60] sm:$0xff]
      %v550 = vld [vmem:[%s266 + $0x68] sm:$0xff]
      %v551 = vld [vmem:[%s266 + $0x70] sm:$0xff]
      %v552 = vld [vmem:[%s266 + $0x78] sm:$0xff]
      %v553 = vld [vmem:[%s4] sm:$0xff]
      %v554 = vld [vmem:[%s4 + $0x8] sm:$0xff]
      %v555 = vld [vmem:[%s4 + $0x10] sm:$0xff]
      %v556 = vld [vmem:[%s4 + $0x18] sm:$0xff]
      %v557 = vld [vmem:[%s4 + $0x20] sm:$0xff]
      %v558 = vld [vmem:[%s4 + $0x28] sm:$0xff]
      %v559 = vld [vmem:[%s4 + $0x30] sm:$0xff]
      %v560 = vld [vmem:[%s4 + $0x38] sm:$0xff]
      %v561 = vld [vmem:[%s4 + $0x40] sm:$0xff]
      %v562 = vld [vmem:[%s4 + $0x48] sm:$0xff]
      %v563 = vld [vmem:[%s4 + $0x50] sm:$0xff]
      %v564 = vld [vmem:[%s4 + $0x58] sm:$0xff]
      %v565 = vld [vmem:[%s4 + $0x60] sm:$0xff]
      %v566 = vld [vmem:[%s4 + $0x68] sm:$0xff]
      %v567 = vld [vmem:[%s4 + $0x70] sm:$0xff]
      %v568 = vld [vmem:[%s4 + $0x78] sm:$0xff]
      %569 = vmatprep.subr.mxu0 0.0
      %570 = vmatpush1.msra.mxu0 %v568
      %571 = vmatprep.subr.mxu0 0.0
      %572 = vmatpush1.msra.mxu0 %v567
      %573 = vmatprep.subr.mxu0 0.0
      %574 = vmatpush1.msra.mxu0 %v566
      %575 = vmatprep.subr.mxu0 0.0
      %576 = vmatpush1.msra.mxu0 %v565
      %577 = vmatprep.subr.mxu0 0.0
      %578 = vmatpush1.msra.mxu0 %v564
      %579 = vmatprep.subr.mxu0 0.0
      %580 = vmatpush1.msra.mxu0 %v563
      %581 = vmatprep.subr.mxu0 0.0
      %582 = vmatpush1.msra.mxu0 %v562
      %583 = vmatprep.subr.mxu0 0.0
      %584 = vmatpush1.msra.mxu0 %v561
      %585 = vmatprep.subr.mxu0 0.0
      %586 = vmatpush1.msra.mxu0 %v560
      %587 = vmatprep.subr.mxu0 0.0
      %588 = vmatpush1.msra.mxu0 %v559
      %589 = vmatprep.subr.mxu0 0.0
      %590 = vmatpush1.msra.mxu0 %v558
      %591 = vmatprep.subr.mxu0 0.0
      %592 = vmatpush1.msra.mxu0 %v557
      %593 = vmatprep.subr.mxu0 0.0
      %594 = vmatpush1.msra.mxu0 %v556
      %595 = vmatprep.subr.mxu0 0.0
      %596 = vmatpush1.msra.mxu0 %v555
      %597 = vmatprep.subr.mxu0 0.0
      %598 = vmatpush1.msra.mxu0 %v554
      %599 = vmatprep.subr.mxu0 0.0
      %600 = vmatpush1.msra.mxu0 %v553
      %601 = vmatprep.subr.mxu0 0.0
      %602 = vmatpush2.msra.mxu0 0.0
      %603 = vmatprep.subr.mxu0 0.0
      %604 = vmatpush2.msra.mxu0 0.0
      %605 = vmatprep.subr.mxu0 0.0
      %606 = vmatpush2.msra.mxu0 0.0
      %607 = vmatprep.subr.mxu0 0.0
      %608 = vmatpush2.msra.mxu0 0.0
      %609 = vmatprep.subr.mxu0 0.0
      %610 = vmatpush2.msra.mxu0 0.0
      %611 = vmatprep.subr.mxu0 0.0
      %612 = vmatpush2.msra.mxu0 0.0
      %613 = vmatprep.subr.mxu0 0.0
      %614 = vmatpush2.msra.mxu0 0.0
      %615 = vmatprep.subr.mxu0 0.0
      %616 = vmatpush2.msra.mxu0 0.0
      %617 = vmatprep.subr.mxu0 0.0
      %618 = vmatpush2.msra.mxu0 0.0
      %619 = vmatprep.subr.mxu0 0.0
      %620 = vmatpush2.msra.mxu0 0.0
      %621 = vmatprep.subr.mxu0 0.0
      %622 = vmatpush2.msra.mxu0 0.0
      %623 = vmatprep.subr.mxu0 0.0
      %624 = vmatpush2.msra.mxu0 0.0
      %625 = vmatprep.subr.mxu0 0.0
      %626 = vmatpush2.msra.mxu0 0.0
      %627 = vmatprep.subr.mxu0 0.0
      %628 = vmatpush2.msra.mxu0 0.0
      %629 = vmatprep.subr.mxu0 0.0
      %630 = vmatpush2.msra.mxu0 0.0
      %631 = vmatprep.subr.mxu0 0.0
      %632 = vmatpush2.msra.mxu0 0.0
      %633 = vmatprep.mubr.f32.mxu0 0.0
      %634 = vmatmul.mubr.f32.gmra.mxu0 %v505
      %v635 = vpop.f32.mrf.mxu0
      %v636 = vadd.f32 0.0, %v635
      %v637 = vpop.f32.mrf.mxu0
      %638 = vmatprep.mubr.f32.mxu0 0.0
      %639 = vmatmul.mubr.f32.gmra.mxu0 %v506
      %v640 = vpop.f32.mrf.mxu0
      %v641 = vadd.f32 0.0, %v640
      %v642 = vpop.f32.mrf.mxu0
      %643 = vmatprep.mubr.f32.mxu0 0.0
      %644 = vmatmul.mubr.f32.gmra.mxu0 %v507
      %v645 = vpop.f32.mrf.mxu0
      %v646 = vadd.f32 0.0, %v645
      %v647 = vpop.f32.mrf.mxu0
      %648 = vmatprep.mubr.f32.mxu0 0.0
      %649 = vmatmul.mubr.f32.gmra.mxu0 %v508
      %v650 = vpop.f32.mrf.mxu0
      %v651 = vadd.f32 0.0, %v650
      %v652 = vpop.f32.mrf.mxu0
      %653 = vmatprep.mubr.f32.mxu0 0.0
      %654 = vmatmul.mubr.f32.gmra.mxu0 %v509
      %v655 = vpop.f32.mrf.mxu0
      %v656 = vadd.f32 0.0, %v655
      %v657 = vpop.f32.mrf.mxu0
      %658 = vmatprep.mubr.f32.mxu0 0.0
      %659 = vmatmul.mubr.f32.gmra.mxu0 %v510
      %v660 = vpop.f32.mrf.mxu0
      %v661 = vadd.f32 0.0, %v660
      %v662 = vpop.f32.mrf.mxu0
      %663 = vmatprep.mubr.f32.mxu0 0.0
      %664 = vmatmul.mubr.f32.gmra.mxu0 %v511
      %v665 = vpop.f32.mrf.mxu0
      %v666 = vadd.f32 0.0, %v665
      %v667 = vpop.f32.mrf.mxu0
      %668 = vmatprep.mubr.f32.mxu0 0.0
      %669 = vmatmul.mubr.f32.gmra.mxu0 %v512
      %v670 = vpop.f32.mrf.mxu0
      %v671 = vadd.f32 0.0, %v670
      %v672 = vpop.f32.mrf.mxu0
      %673 = vmatprep.mubr.f32.mxu0 0.0
      %674 = vmatmul.mubr.f32.gmra.mxu0 %v513
      %v675 = vpop.f32.mrf.mxu0
      %v676 = vadd.f32 0.0, %v675
      %v677 = vpop.f32.mrf.mxu0
      %678 = vmatprep.mubr.f32.mxu0 0.0
      %679 = vmatmul.mubr.f32.gmra.mxu0 %v514
      %v680 = vpop.f32.mrf.mxu0
      %v681 = vadd.f32 0.0, %v680
      %v682 = vpop.f32.mrf.mxu0
      %683 = vmatprep.mubr.f32.mxu0 0.0
      %684 = vmatmul.mubr.f32.gmra.mxu0 %v515
      %v685 = vpop.f32.mrf.mxu0
      %v686 = vadd.f32 0.0, %v685
      %v687 = vpop.f32.mrf.mxu0
      %688 = vmatprep.mubr.f32.mxu0 0.0
      %689 = vmatmul.mubr.f32.gmra.mxu0 %v516
      %v690 = vpop.f32.mrf.mxu0
      %v691 = vadd.f32 0.0, %v690
      %v692 = vpop.f32.mrf.mxu0
      %693 = vmatprep.mubr.f32.mxu0 0.0
      %694 = vmatmul.mubr.f32.gmra.mxu0 %v517
      %v695 = vpop.f32.mrf.mxu0
      %v696 = vadd.f32 0.0, %v695
      %v697 = vpop.f32.mrf.mxu0
      %698 = vmatprep.mubr.f32.mxu0 0.0
      %699 = vmatmul.mubr.f32.gmra.mxu0 %v518
      %v700 = vpop.f32.mrf.mxu0
      %v701 = vadd.f32 0.0, %v700
      %v702 = vpop.f32.mrf.mxu0
      %703 = vmatprep.mubr.f32.mxu0 0.0
      %704 = vmatmul.mubr.f32.gmra.mxu0 %v519
      %v705 = vpop.f32.mrf.mxu0
      %v706 = vadd.f32 0.0, %v705
      %v707 = vpop.f32.mrf.mxu0
      %708 = vmatprep.mubr.f32.mxu0 0.0
      %709 = vmatmul.mubr.f32.gmra.mxu0 %v520
      %v710 = vpop.f32.mrf.mxu0
      %v711 = vadd.f32 0.0, %v710
      %v712 = vpop.f32.mrf.mxu0
      %713 = vmatprep.mubr.f32.mxu0 0.0
      %714 = vmatmul.mubr.f32.gmra.mxu0 %v521
      %v715 = vpop.f32.mrf.mxu0
      %v716 = vadd.f32 0.0, %v715
      %v717 = vpop.f32.mrf.mxu0
      %718 = vmatprep.mubr.f32.mxu0 0.0
      %719 = vmatmul.mubr.f32.gmra.mxu0 %v522
      %v720 = vpop.f32.mrf.mxu0
      %v721 = vadd.f32 0.0, %v720
      %v722 = vpop.f32.mrf.mxu0
      %723 = vmatprep.mubr.f32.mxu0 0.0
      %724 = vmatmul.mubr.f32.gmra.mxu0 %v523
      %v725 = vpop.f32.mrf.mxu0
      %v726 = vadd.f32 0.0, %v725
      %v727 = vpop.f32.mrf.mxu0
      %728 = vmatprep.mubr.f32.mxu0 0.0
      %729 = vmatmul.mubr.f32.gmra.mxu0 %v524
      %v730 = vpop.f32.mrf.mxu0
      %v731 = vadd.f32 0.0, %v730
      %v732 = vpop.f32.mrf.mxu0
      %733 = vmatprep.mubr.f32.mxu0 0.0
      %734 = vmatmul.mubr.f32.gmra.mxu0 %v525
      %v735 = vpop.f32.mrf.mxu0
      %v736 = vadd.f32 0.0, %v735
      %v737 = vpop.f32.mrf.mxu0
      %738 = vmatprep.mubr.f32.mxu0 0.0
      %739 = vmatmul.mubr.f32.gmra.mxu0 %v526
      %v740 = vpop.f32.mrf.mxu0
      %v741 = vadd.f32 0.0, %v740
      %v742 = vpop.f32.mrf.mxu0
      %743 = vmatprep.mubr.f32.mxu0 0.0
      %744 = vmatmul.mubr.f32.gmra.mxu0 %v527
      %v745 = vpop.f32.mrf.mxu0
      %v746 = vadd.f32 0.0, %v745
      %v747 = vpop.f32.mrf.mxu0
      %748 = vmatprep.mubr.f32.mxu0 0.0
      %749 = vmatmul.mubr.f32.gmra.mxu0 %v528
      %v750 = vpop.f32.mrf.mxu0
      %v751 = vadd.f32 0.0, %v750
      %v752 = vpop.f32.mrf.mxu0
      %753 = vmatprep.mubr.f32.mxu0 0.0
      %754 = vmatmul.mubr.f32.gmra.mxu0 %v529
      %v755 = vpop.f32.mrf.mxu0
      %v756 = vadd.f32 0.0, %v755
      %v757 = vpop.f32.mrf.mxu0
      %758 = vmatprep.mubr.f32.mxu0 0.0
      %759 = vmatmul.mubr.f32.gmra.mxu0 %v530
      %v760 = vpop.f32.mrf.mxu0
      %v761 = vadd.f32 0.0, %v760
      %v762 = vpop.f32.mrf.mxu0
      %763 = vmatprep.mubr.f32.mxu0 0.0
      %764 = vmatmul.mubr.f32.gmra.mxu0 %v531
      %v765 = vpop.f32.mrf.mxu0
      %v766 = vadd.f32 0.0, %v765
      %v767 = vpop.f32.mrf.mxu0
      %768 = vmatprep.mubr.f32.mxu0 0.0
      %769 = vmatmul.mubr.f32.gmra.mxu0 %v532
      %v770 = vpop.f32.mrf.mxu0
      %v771 = vadd.f32 0.0, %v770
      %v772 = vpop.f32.mrf.mxu0
      %773 = vmatprep.mubr.f32.mxu0 0.0
      %774 = vmatmul.mubr.f32.gmra.mxu0 %v533
      %v775 = vpop.f32.mrf.mxu0
      %v776 = vadd.f32 0.0, %v775
      %v777 = vpop.f32.mrf.mxu0
      %778 = vmatprep.mubr.f32.mxu0 0.0
      %779 = vmatmul.mubr.f32.gmra.mxu0 %v534
      %v780 = vpop.f32.mrf.mxu0
      %v781 = vadd.f32 0.0, %v780
      %v782 = vpop.f32.mrf.mxu0
      %783 = vmatprep.mubr.f32.mxu0 0.0
      %784 = vmatmul.mubr.f32.gmra.mxu0 %v535
      %v785 = vpop.f32.mrf.mxu0
      %v786 = vadd.f32 0.0, %v785
      %v787 = vpop.f32.mrf.mxu0
      %788 = vmatprep.mubr.f32.mxu0 0.0
      %789 = vmatmul.mubr.f32.gmra.mxu0 %v536
      %v790 = vpop.f32.mrf.mxu0
      %v791 = vadd.f32 0.0, %v790
      %v792 = vpop.f32.mrf.mxu0
      %793 = vdwg.mxu0
      %v794 = vpack.c.bf16 %v641, %v636
      %v795 = vpack.c.bf16 %v651, %v646
      %v796 = vpack.c.bf16 %v661, %v656
      %v797 = vpack.c.bf16 %v671, %v666
      %v798 = vpack.c.bf16 %v681, %v676
      %v799 = vpack.c.bf16 %v691, %v686
      %v800 = vpack.c.bf16 %v701, %v696
      %v801 = vpack.c.bf16 %v711, %v706
      %v802 = vpack.c.bf16 %v721, %v716
      %v803 = vpack.c.bf16 %v731, %v726
      %v804 = vpack.c.bf16 %v741, %v736
      %v805 = vpack.c.bf16 %v751, %v746
      %v806 = vpack.c.bf16 %v761, %v756
      %v807 = vpack.c.bf16 %v771, %v766
      %v808 = vpack.c.bf16 %v781, %v776
      %v809 = vpack.c.bf16 %v791, %v786
      %v826 = vunpack.c.l.b16 %v537
      %v827 = vunpack.c.h.b16 %v537
      %v828 = vunpack.c.l.b16 %v538
      %v829 = vunpack.c.h.b16 %v538
      %v830 = vunpack.c.l.b16 %v539
      %v831 = vunpack.c.h.b16 %v539
      %v832 = vunpack.c.l.b16 %v540
      %v833 = vunpack.c.h.b16 %v540
      %v834 = vunpack.c.l.b16 %v541
      %v835 = vunpack.c.h.b16 %v541
      %v836 = vunpack.c.l.b16 %v542
      %v837 = vunpack.c.h.b16 %v542
      %v838 = vunpack.c.l.b16 %v543
      %v839 = vunpack.c.h.b16 %v543
      %v840 = vunpack.c.l.b16 %v544
      %v841 = vunpack.c.h.b16 %v544
      %v842 = vunpack.c.l.b16 %v545
      %v843 = vunpack.c.h.b16 %v545
      %v844 = vunpack.c.l.b16 %v546
      %v845 = vunpack.c.h.b16 %v546
      %v846 = vunpack.c.l.b16 %v547
      %v847 = vunpack.c.h.b16 %v547
      %v848 = vunpack.c.l.b16 %v548
      %v849 = vunpack.c.h.b16 %v548
      %v850 = vunpack.c.l.b16 %v549
      %v851 = vunpack.c.h.b16 %v549
      %v852 = vunpack.c.l.b16 %v550
      %v853 = vunpack.c.h.b16 %v550
      %v854 = vunpack.c.l.b16 %v551
      %v855 = vunpack.c.h.b16 %v551
      %v856 = vunpack.c.l.b16 %v552
      %v857 = vunpack.c.h.b16 %v552
      %v858 = vpack.c.b16 %v828, %v826
      %v859 = vpack.c.b16 %v829, %v827
      %v860 = vpack.c.b16 %v832, %v830
      %v861 = vpack.c.b16 %v833, %v831
      %v862 = vpack.c.b16 %v836, %v834
      %v863 = vpack.c.b16 %v837, %v835
      %v864 = vpack.c.b16 %v840, %v838
      %v865 = vpack.c.b16 %v841, %v839
      %v866 = vpack.c.b16 %v844, %v842
      %v867 = vpack.c.b16 %v845, %v843
      %v868 = vpack.c.b16 %v848, %v846
      %v869 = vpack.c.b16 %v849, %v847
      %v870 = vpack.c.b16 %v852, %v850
      %v871 = vpack.c.b16 %v853, %v851
      %v872 = vpack.c.b16 %v856, %v854
      %v873 = vpack.c.b16 %v857, %v855
      %890 = vmatprep.subr.bf16.mxu0 0
      %891 = vmatpush1.bf16.msra.mxu0 %v801
      %892 = vmatprep.subr.bf16.mxu0 0
      %893 = vmatpush1.bf16.msra.mxu0 %v800
      %894 = vmatprep.subr.bf16.mxu0 0
      %895 = vmatpush1.bf16.msra.mxu0 %v799
      %896 = vmatprep.subr.bf16.mxu0 0
      %897 = vmatpush1.bf16.msra.mxu0 %v798
      %898 = vmatprep.subr.bf16.mxu0 0
      %899 = vmatpush1.bf16.msra.mxu0 %v797
      %900 = vmatprep.subr.bf16.mxu0 0
      %901 = vmatpush1.bf16.msra.mxu0 %v796
      %902 = vmatprep.subr.bf16.mxu0 0
      %903 = vmatpush1.bf16.msra.mxu0 %v795
      %904 = vmatprep.subr.bf16.mxu0 0
      %905 = vmatpush1.bf16.msra.mxu0 %v794
      %906 = vmatprep.subr.bf16.mxu0 0
      %907 = vmatpush2.bf16.msra.mxu0 %v809
      %908 = vmatprep.subr.bf16.mxu0 0
      %909 = vmatpush2.bf16.msra.mxu0 %v808
      %910 = vmatprep.subr.bf16.mxu0 0
      %911 = vmatpush2.bf16.msra.mxu0 %v807
      %912 = vmatprep.subr.bf16.mxu0 0
      %913 = vmatpush2.bf16.msra.mxu0 %v806
      %914 = vmatprep.subr.bf16.mxu0 0
      %915 = vmatpush2.bf16.msra.mxu0 %v805
      %916 = vmatprep.subr.bf16.mxu0 0
      %917 = vmatpush2.bf16.msra.mxu0 %v804
      %918 = vmatprep.subr.bf16.mxu0 0
      %919 = vmatpush2.bf16.msra.mxu0 %v803
      %920 = vmatprep.subr.bf16.mxu0 0
      %921 = vmatpush2.bf16.msra.mxu0 %v802
      %922 = vmatprep.mubr.bf16.mxu0 %v859
      %923 = vmatmul.mubr.bf16.gmra.mxu0 %v858
      %v924 = vpop.f32.mrf.mxu0
      %v925 = vadd.f32 0.0, %v924
      %v926 = vpop.f32.mrf.mxu0
      %v927 = vpop.f32.mrf.mxu0
      %v928 = vadd.f32 0.0, %v927
      %v929 = vpop.f32.mrf.mxu0
      %930 = vmatprep.mubr.bf16.mxu0 %v861
      %931 = vmatmul.mubr.bf16.gmra.mxu0 %v860
      %v932 = vpop.f32.mrf.mxu0
      %v933 = vadd.f32 0.0, %v932
      %v934 = vpop.f32.mrf.mxu0
      %v935 = vpop.f32.mrf.mxu0
      %v936 = vadd.f32 0.0, %v935
      %v937 = vpop.f32.mrf.mxu0
      %938 = vmatprep.mubr.bf16.mxu0 %v863
      %939 = vmatmul.mubr.bf16.gmra.mxu0 %v862
      %v940 = vpop.f32.mrf.mxu0
      %v941 = vadd.f32 0.0, %v940
      %v942 = vpop.f32.mrf.mxu0
      %v943 = vpop.f32.mrf.mxu0
      %v944 = vadd.f32 0.0, %v943
      %v945 = vpop.f32.mrf.mxu0
      %946 = vmatprep.mubr.bf16.mxu0 %v865
      %947 = vmatmul.mubr.bf16.gmra.mxu0 %v864
      %v948 = vpop.f32.mrf.mxu0
      %v949 = vadd.f32 0.0, %v948
      %v950 = vpop.f32.mrf.mxu0
      %v951 = vpop.f32.mrf.mxu0
      %v952 = vadd.f32 0.0, %v951
      %v953 = vpop.f32.mrf.mxu0
      %954 = vmatprep.mubr.bf16.mxu0 %v867
      %955 = vmatmul.mubr.bf16.gmra.mxu0 %v866
      %v956 = vpop.f32.mrf.mxu0
      %v957 = vadd.f32 0.0, %v956
      %v958 = vpop.f32.mrf.mxu0
      %v959 = vpop.f32.mrf.mxu0
      %v960 = vadd.f32 0.0, %v959
      %v961 = vpop.f32.mrf.mxu0
      %962 = vmatprep.mubr.bf16.mxu0 %v869
      %963 = vmatmul.mubr.bf16.gmra.mxu0 %v868
      %v964 = vpop.f32.mrf.mxu0
      %v965 = vadd.f32 0.0, %v964
      %v966 = vpop.f32.mrf.mxu0
      %v967 = vpop.f32.mrf.mxu0
      %v968 = vadd.f32 0.0, %v967
      %v969 = vpop.f32.mrf.mxu0
      %970 = vmatprep.mubr.bf16.mxu0 %v871
      %971 = vmatmul.mubr.bf16.gmra.mxu0 %v870
      %v972 = vpop.f32.mrf.mxu0
      %v973 = vadd.f32 0.0, %v972
      %v974 = vpop.f32.mrf.mxu0
      %v975 = vpop.f32.mrf.mxu0
      %v976 = vadd.f32 0.0, %v975
      %v977 = vpop.f32.mrf.mxu0
      %978 = vmatprep.mubr.bf16.mxu0 %v873
      %979 = vmatmul.mubr.bf16.gmra.mxu0 %v872
      %v980 = vpop.f32.mrf.mxu0
      %v981 = vadd.f32 0.0, %v980
      %v982 = vpop.f32.mrf.mxu0
      %v983 = vpop.f32.mrf.mxu0
      %v984 = vadd.f32 0.0, %v983
      %v985 = vpop.f32.mrf.mxu0
      %986 = vdwg.mxu0
      %v987 = vld [vmem:[%s272] sm:$0xff]
      %v988 = vld [vmem:[%s272 + $0x8] sm:$0xff]
      %v989 = vld [vmem:[%s272 + $0x10] sm:$0xff]
      %v990 = vld [vmem:[%s272 + $0x18] sm:$0xff]
      %v991 = vld [vmem:[%s272 + $0x20] sm:$0xff]
      %v992 = vld [vmem:[%s272 + $0x28] sm:$0xff]
      %v993 = vld [vmem:[%s272 + $0x30] sm:$0xff]
      %v994 = vld [vmem:[%s272 + $0x38] sm:$0xff]
      %v995 = vld [vmem:[%s272 + $0x40] sm:$0xff]
      %v996 = vld [vmem:[%s272 + $0x48] sm:$0xff]
      %v997 = vld [vmem:[%s272 + $0x50] sm:$0xff]
      %v998 = vld [vmem:[%s272 + $0x58] sm:$0xff]
      %v999 = vld [vmem:[%s272 + $0x60] sm:$0xff]
      %v1000 = vld [vmem:[%s272 + $0x68] sm:$0xff]
      %v1001 = vld [vmem:[%s272 + $0x70] sm:$0xff]
      %v1002 = vld [vmem:[%s272 + $0x78] sm:$0xff]
      %1004 = vset.pattern.permute.xlu0 0
      %1005 = vperm.xlu0 %1004, %v987
      %v1006 = vpop.permute.xlu0 %1005
      %1009 = vset.pattern.permute.xlu0 0
      %1010 = vperm.xlu0 %1009, %v988
      %v1011 = vpop.permute.xlu0 %1010
      %1014 = vset.pattern.permute.xlu0 0
      %1015 = vperm.xlu0 %1014, %v989
      %v1016 = vpop.permute.xlu0 %1015
      %1019 = vset.pattern.permute.xlu0 0
      %1020 = vperm.xlu0 %1019, %v990
      %v1021 = vpop.permute.xlu0 %1020
      %1024 = vset.pattern.permute.xlu0 0
      %1025 = vperm.xlu0 %1024, %v991
      %v1026 = vpop.permute.xlu0 %1025
      %1029 = vset.pattern.permute.xlu0 0
      %1030 = vperm.xlu0 %1029, %v992
      %v1031 = vpop.permute.xlu0 %1030
      %1034 = vset.pattern.permute.xlu0 0
      %1035 = vperm.xlu0 %1034, %v993
      %v1036 = vpop.permute.xlu0 %1035
      %1039 = vset.pattern.permute.xlu0 0
      %1040 = vperm.xlu0 %1039, %v994
      %v1041 = vpop.permute.xlu0 %1040
      %1044 = vset.pattern.permute.xlu0 0
      %1045 = vperm.xlu0 %1044, %v995
      %v1046 = vpop.permute.xlu0 %1045
      %1049 = vset.pattern.permute.xlu0 0
      %1050 = vperm.xlu0 %1049, %v996
      %v1051 = vpop.permute.xlu0 %1050
      %1054 = vset.pattern.permute.xlu0 0
      %1055 = vperm.xlu0 %1054, %v997
      %v1056 = vpop.permute.xlu0 %1055
      %1059 = vset.pattern.permute.xlu0 0
      %1060 = vperm.xlu0 %1059, %v998
      %v1061 = vpop.permute.xlu0 %1060
      %1064 = vset.pattern.permute.xlu0 0
      %1065 = vperm.xlu0 %1064, %v999
      %v1066 = vpop.permute.xlu0 %1065
      %1069 = vset.pattern.permute.xlu0 0
      %1070 = vperm.xlu0 %1069, %v1000
      %v1071 = vpop.permute.xlu0 %1070
      %1074 = vset.pattern.permute.xlu0 0
      %1075 = vperm.xlu0 %1074, %v1001
      %v1076 = vpop.permute.xlu0 %1075
      %1079 = vset.pattern.permute.xlu0 0
      %1080 = vperm.xlu0 %1079, %v1002
      %v1081 = vpop.permute.xlu0 %1080
      %v1083 = vmul.f32 %v925, %v1006
      %v1084 = vmul.f32 %v928, %v1011
      %v1085 = vmul.f32 %v933, %v1016
      %v1086 = vmul.f32 %v936, %v1021
      %v1087 = vmul.f32 %v941, %v1026
      %v1088 = vmul.f32 %v944, %v1031
      %v1089 = vmul.f32 %v949, %v1036
      %v1090 = vmul.f32 %v952, %v1041
      %v1091 = vmul.f32 %v957, %v1046
      %v1092 = vmul.f32 %v960, %v1051
      %v1093 = vmul.f32 %v965, %v1056
      %v1094 = vmul.f32 %v968, %v1061
      %v1095 = vmul.f32 %v973, %v1066
      %v1096 = vmul.f32 %v976, %v1071
      %v1097 = vmul.f32 %v981, %v1076
      %v1098 = vmul.f32 %v984, %v1081
      %v1099 = vld [vmem:[%s5] sm:$0x1]
      %v1101 = vlaneseq
      %v1102 = vshrl.u32 %v1101, 7
      %v1103 = vsub.s32 0, %v1102
      %v1104 = vrot.slane %v1099, %v1103
      %v1106 = vadd.f32 %v1083, %v1104
      %v1107 = vadd.f32 %v1084, %v1104
      %v1108 = vadd.f32 %v1085, %v1104
      %v1109 = vadd.f32 %v1086, %v1104
      %v1110 = vadd.f32 %v1087, %v1104
      %v1111 = vadd.f32 %v1088, %v1104
      %v1112 = vadd.f32 %v1089, %v1104
      %v1113 = vadd.f32 %v1090, %v1104
      %v1114 = vadd.f32 %v1091, %v1104
      %v1115 = vadd.f32 %v1092, %v1104
      %v1116 = vadd.f32 %v1093, %v1104
      %v1117 = vadd.f32 %v1094, %v1104
      %v1118 = vadd.f32 %v1095, %v1104
      %v1119 = vadd.f32 %v1096, %v1104
      %v1120 = vadd.f32 %v1097, %v1104
      %v1121 = vadd.f32 %v1098, %v1104
      %v1122 = vmax.f32 %v1106, 0.0
      %v1123 = vmax.f32 %v1107, 0.0
      %v1124 = vmax.f32 %v1108, 0.0
      %v1125 = vmax.f32 %v1109, 0.0
      %v1126 = vmax.f32 %v1110, 0.0
      %v1127 = vmax.f32 %v1111, 0.0
      %v1128 = vmax.f32 %v1112, 0.0
      %v1129 = vmax.f32 %v1113, 0.0
      %v1130 = vmax.f32 %v1114, 0.0
      %v1131 = vmax.f32 %v1115, 0.0
      %v1132 = vmax.f32 %v1116, 0.0
      %v1133 = vmax.f32 %v1117, 0.0
      %v1134 = vmax.f32 %v1118, 0.0
      %v1135 = vmax.f32 %v1119, 0.0
      %v1136 = vmax.f32 %v1120, 0.0
      %v1137 = vmax.f32 %v1121, 0.0
      %1138 = vst [vmem:[%s278] sm:$0xff] %v1122
      %1139 = vst [vmem:[%s278 + $0x8] sm:$0xff] %v1123
      %1140 = vst [vmem:[%s278 + $0x10] sm:$0xff] %v1124
      %1141 = vst [vmem:[%s278 + $0x18] sm:$0xff] %v1125
      %1142 = vst [vmem:[%s278 + $0x20] sm:$0xff] %v1126
      %1143 = vst [vmem:[%s278 + $0x28] sm:$0xff] %v1127
      %1144 = vst [vmem:[%s278 + $0x30] sm:$0xff] %v1128
      %1145 = vst [vmem:[%s278 + $0x38] sm:$0xff] %v1129
      %1146 = vst [vmem:[%s278 + $0x40] sm:$0xff] %v1130
      %1147 = vst [vmem:[%s278 + $0x48] sm:$0xff] %v1131
      %1148 = vst [vmem:[%s278 + $0x50] sm:$0xff] %v1132
      %1149 = vst [vmem:[%s278 + $0x58] sm:$0xff] %v1133
      %1150 = vst [vmem:[%s278 + $0x60] sm:$0xff] %v1134
      %1151 = vst [vmem:[%s278 + $0x68] sm:$0xff] %v1135
      %1152 = vst [vmem:[%s278 + $0x70] sm:$0xff] %v1136
      %1153 = vst [vmem:[%s278 + $0x78] sm:$0xff] %v1137
      %s1154 = smul.u32 16, %s17
      %p1155 = scmp.lt.s32.totalorder %s1154, 31
      %s1156 = scalar_select %p1155, %s1154, 31
      %s1157 = smul.addr %s1156, 8
      %s1158 = scalar_lea.vmem %s6, %s1157
      // Predicated region
      $region45: #{gcn_extract_forward.2} parent=43 // pred_check
        %p1159 = pneg %p171
      $region46: #{gcn_extract_forward.2} parent=43 // pred_check_branch
        %1161 = sbr.rel (%p1159) target = $region48
      $region47: #{gcn_extract_forward.2} parent=43 // pred_region
        %s1162 = smul.u32 16, %s17
      $region48: #{gcn_extract_forward.2} parent=43 // pred_fallthru
        _
    $region44: #{gcn_extract_forward.2} parent=5 // pred_fallthru
      _
    %p1163 = scmp.le.s32.totalorder 2, %s12
    // Predicated region
    $region49: #{gcn_extract_forward.2} parent=5 // pred_check
      %p1164 = pneg %p1163
    $region50: #{gcn_extract_forward.2} parent=5 // pred_check_branch
      %1166 = sbr.rel (%p1164) target = $region52
    $region51: #{gcn_extract_forward.2} parent=5 // pred_region
      %s1167 = ssub.s32 %s12, 2
      // Predicated region
      $region53: #{gcn_extract_forward.2} parent=51 // pred_check
        %p1168 = pneg %p177
      $region54: #{gcn_extract_forward.2} parent=51 // pred_check_branch
        %1170 = sbr.rel (%p1168) target = $region56
      $region55: #{gcn_extract_forward.2} parent=51 // pred_region
        %s1171 = smul.u32 16, %s18
        %p1172 = scmp.lt.s32.totalorder %s1171, 31
        %s1173 = scalar_select %p1172, %s1171, 31
        %s1174 = smul.addr %s1173, 8
        %s1175 = scalar_lea.vmem %s6, %s1174
      $region56: #{gcn_extract_forward.2} parent=51 // pred_fallthru
        _
    $region52: #{gcn_extract_forward.2} parent=5 // pred_fallthru
      _
  $region6: #{gcn_extract_forward.2} parent=0 // loop_footer
    %s16 = sadd.s32 1, %s12
  $region7: #{gcn_extract_forward.2} parent=0 // loop_footer_branch
    %11 = sbr.rel target = $region3
  $region8: #{gcn_extract_forward.2} parent=0 // loop_exit
    _

// kernel: gcn_extract_forward.3
$region0: #{gcn_extract_forward.3}
  #allocation0 [shape = 'u32[]', space=smem, size = 0x4, offset = 0x4, fixed_abs, tag = 'smem constant byte address 0x4 - core index']
  #allocation1 [shape = 'u32[144,128]{1,0:T(1,128)}', space=vmem, size = 0x12000, scoped, tag = 'internal scratch']
  %s0 = inlined_call_operand.vmem [shape: bf16[256,256], index: 0, kind: input, shape index: {}]
  %s1 = inlined_call_operand.vmem [shape: f32[256,1], index: 1, kind: input, shape index: {}, may-alias: {1,2}]
  %s2 = inlined_call_operand.vmem [shape: f32[256,1], index: 2, kind: input, shape index: {}, may-alias: {1,2}]
  %s3 = inlined_call_operand.vmem [shape: f32[256,128], index: 3, kind: input, shape index: {}]
  %s4 = inlined_call_operand.vmem [shape: f32[128,32], index: 4, kind: input, shape index: {}]
  %s5 = inlined_call_operand.vmem [shape: f32[1,32], index: 5, kind: input, shape index: {}]
  %s6 = inlined_call_operand.vmem [shape: f32[32,128], index: 6, kind: input, shape index: {}]
  %s7 = inlined_call_operand.vmem [shape: f32[1,128], index: 7, kind: input, shape index: {}]
  %s8 = inlined_call_operand.vmem [shape: f32[256,32], index: 8, kind: output, shape index: {0}]
  %s9 = inlined_call_operand.vmem [shape: f32[256,128], index: 9, kind: output, shape index: {1}]
  %10 = xla_tuple %s8, %s9
  %s11 = sld [smem:[#allocation0]]
  $region73: #{gcn_extract_forward.3} parent=0
    _
  %s13 = ssub.s32 1, %s11
  %s14 = scalar_select 0, %s13, %s11
  loop: start=0, step=1, limit=4
  $region2: #{gcn_extract_forward.3} parent=0 // loop_pre_header
    _
  $region3: #{gcn_extract_forward.3} parent=0 // loop_header
    %s16 = sphi 0, %s20
    %p17 = scmp.ge.s32.totalorder %s16, 4
    %s26 = sphi 0, %s28
    %s29 = sphi 0, %s26
    %s30 = sphi 0, %s29
    %s46 = sphi 0, %s30
    %s52 = sphi 0, %s54
    %s55 = sphi 0, %s52
    %s56 = sphi 0, %s55
    %s72 = sphi 0, %s56
    %s76 = sphi 0, %s76
    %s78 = sphi 0, %s76
    %s79 = sphi 0, %s78
    %s93 = sphi 0, %s79
    %s97 = sphi 0, %s97
    %s99 = sphi 0, %s97
    %s100 = sphi 0, %s99
    %s114 = sphi 0, %s100
    %s118 = sphi 0, %s118
    %s120 = sphi 0, %s118
    %s121 = sphi 0, %s120
    %s135 = sphi 0, %s121
    %s139 = sphi 0, %s139
    %s141 = sphi 0, %s139
    %s142 = sphi 0, %s141
    %s156 = sphi 0, %s142
    %s160 = sphi 0, %s160
    %s162 = sphi 0, %s160
    %s163 = sphi 0, %s162
    %s177 = sphi 0, %s163
    %s181 = sphi 0, %s181
    %s183 = sphi 0, %s181
    %s184 = sphi 0, %s183
    %s198 = sphi 0, %s184
    %s204 = sphi 0, %s206
    %s207 = sphi 0, %s204
    %s208 = sphi 0, %s207
    %s224 = sphi 0, %s208
    %s230 = sphi 0, %s232
    %s233 = sphi 0, %s230
    %s234 = sphi 0, %s233
    %s250 = sphi 0, %s234
  $region4: #{gcn_extract_forward.3} parent=0 // loop_header_branch
    %19 = sbr.rel (%p17) target = $region8
  $region5: #{gcn_extract_forward.3} parent=0 // loop_body
    %s21 = ssub.s32 %s16, 1
    %s22 = ssub.s32 %s16, 2
    %s23 = sadd.s32 %s16, 1
    %s24 = ssub.s32 %s16, %s23
    %p25 = scmp.eq.s32.totalorder %s24, 0
    %s27 = sadd.s32 %s26, 1
    %s28 = scalar_select %p25, %s26, %s27
    %p31 = pneg %p25
    %p32 = scmp.eq.s32.totalorder %s16, 1
    %p33 = por %p31, %p32
    %p34 = scmp.ne.s32.totalorder %s26, %s29
    %p35 = scmp.eq.s32.totalorder %s16, 0
    %p36 = por %p34, %p35
    %p37 = scmp.ne.s32.totalorder %s26, %s29
    %p38 = scmp.eq.s32.totalorder %s21, 1
    %p39 = por %p37, %p38
    %p40 = scmp.ne.s32.totalorder %s29, %s30
    %p41 = scmp.eq.s32.totalorder %s21, 0
    %p42 = por %p40, %p41
    %p43 = scmp.ne.s32.totalorder %s29, %s30
    %p44 = scmp.eq.s32.totalorder %s22, 1
    %p45 = por %p43, %p44
    %p47 = scmp.ne.s32.totalorder %s30, %s46
    %p48 = scmp.eq.s32.totalorder %s22, 0
    %p49 = por %p47, %p48
    %s50 = ssub.s32 %s16, %s23
    %p51 = scmp.eq.s32.totalorder %s50, 0
    %s53 = sadd.s32 %s52, 1
    %s54 = scalar_select %p51, %s52, %s53
    %p57 = pneg %p51
    %p58 = scmp.eq.s32.totalorder %s16, 1
    %p59 = por %p57, %p58
    %p60 = scmp.ne.s32.totalorder %s52, %s55
    %p61 = scmp.eq.s32.totalorder %s16, 0
    %p62 = por %p60, %p61
    %p63 = scmp.ne.s32.totalorder %s52, %s55
    %p64 = scmp.eq.s32.totalorder %s21, 1
    %p65 = por %p63, %p64
    %p66 = scmp.ne.s32.totalorder %s55, %s56
    %p67 = scmp.eq.s32.totalorder %s21, 0
    %p68 = por %p66, %p67
    %p69 = scmp.ne.s32.totalorder %s55, %s56
    %p70 = scmp.eq.s32.totalorder %s22, 1
    %p71 = por %p69, %p70
    %p73 = scmp.ne.s32.totalorder %s56, %s72
    %p74 = scmp.eq.s32.totalorder %s22, 0
    %p75 = por %p73, %p74
    %s77 = sadd.s32 %s76, 1
    %p80 = scmp.eq.s32.totalorder %s16, 1
    %p81 = scmp.ne.s32.totalorder %s76, %s78
    %p82 = scmp.eq.s32.totalorder %s16, 0
    %p83 = por %p81, %p82
    %p84 = scmp.ne.s32.totalorder %s76, %s78
    %p85 = scmp.eq.s32.totalorder %s21, 1
    %p86 = por %p84, %p85
    %p87 = scmp.ne.s32.totalorder %s78, %s79
    %p88 = scmp.eq.s32.totalorder %s21, 0
    %p89 = por %p87, %p88
    %p90 = scmp.ne.s32.totalorder %s78, %s79
    %p91 = scmp.eq.s32.totalorder %s22, 1
    %p92 = por %p90, %p91
    %p94 = scmp.ne.s32.totalorder %s79, %s93
    %p95 = scmp.eq.s32.totalorder %s22, 0
    %p96 = por %p94, %p95
    %s98 = sadd.s32 %s97, 1
    %p101 = scmp.eq.s32.totalorder %s16, 1
    %p102 = scmp.ne.s32.totalorder %s97, %s99
    %p103 = scmp.eq.s32.totalorder %s16, 0
    %p104 = por %p102, %p103
    %p105 = scmp.ne.s32.totalorder %s97, %s99
    %p106 = scmp.eq.s32.totalorder %s21, 1
    %p107 = por %p105, %p106
    %p108 = scmp.ne.s32.totalorder %s99, %s100
    %p109 = scmp.eq.s32.totalorder %s21, 0
    %p110 = por %p108, %p109
    %p111 = scmp.ne.s32.totalorder %s99, %s100
    %p112 = scmp.eq.s32.totalorder %s22, 1
    %p113 = por %p111, %p112
    %p115 = scmp.ne.s32.totalorder %s100, %s114
    %p116 = scmp.eq.s32.totalorder %s22, 0
    %p117 = por %p115, %p116
    %s119 = sadd.s32 %s118, 1
    %p122 = scmp.eq.s32.totalorder %s16, 1
    %p123 = scmp.ne.s32.totalorder %s118, %s120
    %p124 = scmp.eq.s32.totalorder %s16, 0
    %p125 = por %p123, %p124
    %p126 = scmp.ne.s32.totalorder %s118, %s120
    %p127 = scmp.eq.s32.totalorder %s21, 1
    %p128 = por %p126, %p127
    %p129 = scmp.ne.s32.totalorder %s120, %s121
    %p130 = scmp.eq.s32.totalorder %s21, 0
    %p131 = por %p129, %p130
    %p132 = scmp.ne.s32.totalorder %s120, %s121
    %p133 = scmp.eq.s32.totalorder %s22, 1
    %p134 = por %p132, %p133
    %p136 = scmp.ne.s32.totalorder %s121, %s135
    %p137 = scmp.eq.s32.totalorder %s22, 0
    %p138 = por %p136, %p137
    %s140 = sadd.s32 %s139, 1
    %p143 = scmp.eq.s32.totalorder %s16, 1
    %p144 = scmp.ne.s32.totalorder %s139, %s141
    %p145 = scmp.eq.s32.totalorder %s16, 0
    %p146 = por %p144, %p145
    %p147 = scmp.ne.s32.totalorder %s139, %s141
    %p148 = scmp.eq.s32.totalorder %s21, 1
    %p149 = por %p147, %p148
    %p150 = scmp.ne.s32.totalorder %s141, %s142
    %p151 = scmp.eq.s32.totalorder %s21, 0
    %p152 = por %p150, %p151
    %p153 = scmp.ne.s32.totalorder %s141, %s142
    %p154 = scmp.eq.s32.totalorder %s22, 1
    %p155 = por %p153, %p154
    %p157 = scmp.ne.s32.totalorder %s142, %s156
    %p158 = scmp.eq.s32.totalorder %s22, 0
    %p159 = por %p157, %p158
    %s161 = sadd.s32 %s160, 1
    %p164 = scmp.eq.s32.totalorder %s16, 1
    %p165 = scmp.ne.s32.totalorder %s160, %s162
    %p166 = scmp.eq.s32.totalorder %s16, 0
    %p167 = por %p165, %p166
    %p168 = scmp.ne.s32.totalorder %s160, %s162
    %p169 = scmp.eq.s32.totalorder %s21, 1
    %p170 = por %p168, %p169
    %p171 = scmp.ne.s32.totalorder %s162, %s163
    %p172 = scmp.eq.s32.totalorder %s21, 0
    %p173 = por %p171, %p172
    %p174 = scmp.ne.s32.totalorder %s162, %s163
    %p175 = scmp.eq.s32.totalorder %s22, 1
    %p176 = por %p174, %p175
    %p178 = scmp.ne.s32.totalorder %s163, %s177
    %p179 = scmp.eq.s32.totalorder %s22, 0
    %p180 = por %p178, %p179
    %s182 = sadd.s32 %s181, 1
    %p185 = scmp.eq.s32.totalorder %s16, 1
    %p186 = scmp.ne.s32.totalorder %s181, %s183
    %p187 = scmp.eq.s32.totalorder %s16, 0
    %p188 = por %p186, %p187
    %p189 = scmp.ne.s32.totalorder %s181, %s183
    %p190 = scmp.eq.s32.totalorder %s21, 1
    %p191 = por %p189, %p190
    %p192 = scmp.ne.s32.totalorder %s183, %s184
    %p193 = scmp.eq.s32.totalorder %s21, 0
    %p194 = por %p192, %p193
    %p195 = scmp.ne.s32.totalorder %s183, %s184
    %p196 = scmp.eq.s32.totalorder %s22, 1
    %p197 = por %p195, %p196
    %p199 = scmp.ne.s32.totalorder %s184, %s198
    %p200 = scmp.eq.s32.totalorder %s22, 0
    %p201 = por %p199, %p200
    %s202 = ssub.s32 %s16, %s23
    %p203 = scmp.eq.s32.totalorder %s202, 0
    %s205 = sadd.s32 %s204, 1
    %s206 = scalar_select %p203, %s204, %s205
    %p209 = pneg %p203
    %p210 = scmp.eq.s32.totalorder %s16, 1
    %p211 = por %p209, %p210
    %p212 = scmp.ne.s32.totalorder %s204, %s207
    %p213 = scmp.eq.s32.totalorder %s16, 0
    %p214 = por %p212, %p213
    %p215 = scmp.ne.s32.totalorder %s204, %s207
    %p216 = scmp.eq.s32.totalorder %s21, 1
    %p217 = por %p215, %p216
    %p218 = scmp.ne.s32.totalorder %s207, %s208
    %p219 = scmp.eq.s32.totalorder %s21, 0
    %p220 = por %p218, %p219
    %p221 = scmp.ne.s32.totalorder %s207, %s208
    %p222 = scmp.eq.s32.totalorder %s22, 1
    %p223 = por %p221, %p222
    %p225 = scmp.ne.s32.totalorder %s208, %s224
    %p226 = scmp.eq.s32.totalorder %s22, 0
    %p227 = por %p225, %p226
    %s228 = ssub.s32 %s16, %s23
    %p229 = scmp.eq.s32.totalorder %s228, 0
    %s231 = sadd.s32 %s230, 1
    %s232 = scalar_select %p229, %s230, %s231
    %p235 = pneg %p229
    %p236 = scmp.eq.s32.totalorder %s16, 1
    %p237 = por %p235, %p236
    %p238 = scmp.ne.s32.totalorder %s230, %s233
    %p239 = scmp.eq.s32.totalorder %s16, 0
    %p240 = por %p238, %p239
    %p241 = scmp.ne.s32.totalorder %s230, %s233
    %p242 = scmp.eq.s32.totalorder %s21, 1
    %p243 = por %p241, %p242
    %p244 = scmp.ne.s32.totalorder %s233, %s234
    %p245 = scmp.eq.s32.totalorder %s21, 0
    %p246 = por %p244, %p245
    %p247 = scmp.ne.s32.totalorder %s233, %s234
    %p248 = scmp.eq.s32.totalorder %s22, 1
    %p249 = por %p247, %p248
    %p251 = scmp.ne.s32.totalorder %s234, %s250
    %p252 = scmp.eq.s32.totalorder %s22, 0
    %p253 = por %p251, %p252
    %p254 = scmp.le.s32.totalorder 1, %s16
    %p255 = scmp.lt.s32.totalorder %s16, 3
    %p256 = pnand %p254, %p255
    %p257 = pneg %p256
    // Predicated region
    $region9: #{gcn_extract_forward.3} parent=5 // pred_check
      _
    $region10: #{gcn_extract_forward.3} parent=5 // pred_check_branch
      %259 = sbr.rel (%p256) target = $region12
    $region11: #{gcn_extract_forward.3} parent=5 // pred_region
      %s260 = ssub.s32 %s16, 1
      // Predicated region
      $region13: #{gcn_extract_forward.3} parent=11 // pred_check
        %p261 = pneg %p89
      $region14: #{gcn_extract_forward.3} parent=11 // pred_check_branch
        %263 = sbr.rel (%p261) target = $region16
      $region15: #{gcn_extract_forward.3} parent=11 // pred_region
        _
      $region16: #{gcn_extract_forward.3} parent=11 // pred_fallthru
        _
      // Predicated region
      $region17: #{gcn_extract_forward.3} parent=11 // pred_check
        %p264 = pneg %p110
      $region18: #{gcn_extract_forward.3} parent=11 // pred_check_branch
        %266 = sbr.rel (%p264) target = $region20
      $region19: #{gcn_extract_forward.3} parent=11 // pred_region
        _
      $region20: #{gcn_extract_forward.3} parent=11 // pred_fallthru
        _
      // Predicated region
      $region21: #{gcn_extract_forward.3} parent=11 // pred_check
        %p267 = pneg %p131
      $region22: #{gcn_extract_forward.3} parent=11 // pred_check_branch
        %269 = sbr.rel (%p267) target = $region24
      $region23: #{gcn_extract_forward.3} parent=11 // pred_region
        _
      $region24: #{gcn_extract_forward.3} parent=11 // pred_fallthru
        _
      // Predicated region
      $region25: #{gcn_extract_forward.3} parent=11 // pred_check
        %p270 = pneg %p152
      $region26: #{gcn_extract_forward.3} parent=11 // pred_check_branch
        %272 = sbr.rel (%p270) target = $region28
      $region27: #{gcn_extract_forward.3} parent=11 // pred_region
        _
      $region28: #{gcn_extract_forward.3} parent=11 // pred_fallthru
        _
      // Predicated region
      $region29: #{gcn_extract_forward.3} parent=11 // pred_check
        %p273 = pneg %p173
      $region30: #{gcn_extract_forward.3} parent=11 // pred_check_branch
        %275 = sbr.rel (%p273) target = $region32
      $region31: #{gcn_extract_forward.3} parent=11 // pred_region
        _
      $region32: #{gcn_extract_forward.3} parent=11 // pred_fallthru
        _
      // Predicated region
      $region33: #{gcn_extract_forward.3} parent=11 // pred_check
        %p276 = pneg %p194
      $region34: #{gcn_extract_forward.3} parent=11 // pred_check_branch
        %278 = sbr.rel (%p276) target = $region36
      $region35: #{gcn_extract_forward.3} parent=11 // pred_region
        _
      $region36: #{gcn_extract_forward.3} parent=11 // pred_fallthru
        _
    $region12: #{gcn_extract_forward.3} parent=5 // pred_fallthru
      _
    %p279 = scmp.lt.s32.totalorder %s16, 2
    // Predicated region
    $region37: #{gcn_extract_forward.3} parent=5 // pred_check
      %p280 = pneg %p279
    $region38: #{gcn_extract_forward.3} parent=5 // pred_check_branch
      %282 = sbr.rel (%p280) target = $region40
    $region39: #{gcn_extract_forward.3} parent=5 // pred_region
      // Predicated region
      $region41: #{gcn_extract_forward.3} parent=39 // pred_check
        %p283 = pneg %p36
      $region42: #{gcn_extract_forward.3} parent=39 // pred_check_branch
        %285 = sbr.rel (%p283) target = $region44
      $region43: #{gcn_extract_forward.3} parent=39 // pred_region
        %s286 = smul.u32 16, %s16
        %p287 = scmp.lt.s32.totalorder %s286, 31
        %s288 = scalar_select %p287, %s286, 31
        %s289 = smul.addr %s288, 2
        %s290 = smul.addr %s289, 4
        %s291 = scalar_lea.vmem %s0, %s290
        %s292 = smul.u32 16, %s16
      $region44: #{gcn_extract_forward.3} parent=39 // pred_fallthru
        _
      // Predicated region
      $region45: #{gcn_extract_forward.3} parent=39 // pred_check
        %p293 = pneg %p62
      $region46: #{gcn_extract_forward.3} parent=39 // pred_check_branch
        %295 = sbr.rel (%p293) target = $region48
      $region47: #{gcn_extract_forward.3} parent=39 // pred_region
        %s296 = smul.u32 16, %s16
        %p297 = scmp.lt.s32.totalorder %s296, 31
        %s298 = scalar_select %p297, %s296, 31
        %s299 = smul.addr %s298, 8
        %s300 = scalar_lea.vmem %s1, %s299
        %s301 = smul.u32 16, %s16
      $region48: #{gcn_extract_forward.3} parent=39 // pred_fallthru
        _
    $region40: #{gcn_extract_forward.3} parent=5 // pred_fallthru
      _
    %p302 = scmp.le.s32.totalorder 1, %s16
    %p303 = scmp.lt.s32.totalorder %s16, 3
    %p304 = pnand %p302, %p303
    %p305 = pneg %p304
    // Predicated region
    $region49: #{gcn_extract_forward.3} parent=5 // pred_check
      _
    $region50: #{gcn_extract_forward.3} parent=5 // pred_check_branch
      %307 = sbr.rel (%p304) target = $region52
    $region51: #{gcn_extract_forward.3} parent=5 // pred_region
      %s308 = ssub.s32 %s16, 1
      %s309 = smul.u32 16, %s21
      %p310 = scmp.lt.s32.totalorder %s309, 31
      %s311 = scalar_select %p310, %s309, 31
      %s312 = smul.addr %s311, 2
      %s313 = smul.addr %s312, 4
      %s314 = scalar_lea.vmem %s0, %s313
      %p315 = pneg %p42
      %p316 = pneg %p39
      %s317 = smul.u32 16, %s21
      %p318 = scmp.lt.s32.totalorder %s317, 31
      %s319 = scalar_select %p318, %s317, 31
      %s320 = smul.addr %s319, 8
      %s321 = scalar_lea.vmem %s1, %s320
      %p322 = pneg %p68
      %p323 = pneg %p65
      %p324 = pneg %p89
      %p325 = pneg %p86
      %p326 = pneg %p110
      %p327 = pneg %p107
      %p328 = pneg %p131
      %p329 = pneg %p128
      %p330 = pneg %p152
      %p331 = pneg %p149
      %p332 = pneg %p173
      %p333 = pneg %p170
      %p334 = pneg %p194
      %p335 = pneg %p191
      %p336 = pneg %p220
      %p337 = pneg %p217
      %s338 = smul.u32 16, %s21
      %p339 = scmp.lt.s32.totalorder %s338, 31
      %s340 = scalar_select %p339, %s338, 31
      %s341 = smul.addr %s340, 8
      %s342 = scalar_lea.vmem %s8, %s341
      %p343 = pneg %p246
      %p344 = pneg %p243
      %s345 = smul.u32 16, %s21
      %p346 = scmp.lt.s32.totalorder %s345, 31
      %s347 = scalar_select %p346, %s345, 31
      %s348 = smul.addr %s347, 8
      %s349 = scalar_lea.vmem %s9, %s348
      %s350 = smul.u32 16, %s21
      %p351 = scmp.lt.s32.totalorder %s350, 31
      %s352 = scalar_select %p351, %s350, 31
      %s353 = smul.addr %s352, 2
      %s354 = smul.addr %s353, 4
      %s355 = scalar_lea.vmem %s0, %s354
      %s356 = smul.u32 16, %s21
      %s357 = smul.u32 16, %s21
      %p358 = scmp.lt.s32.totalorder %s357, 31
      %s359 = scalar_select %p358, %s357, 31
      %s360 = smul.addr %s359, 8
      %s361 = scalar_lea.vmem %s1, %s360
      %s362 = smul.u32 16, %s21
      %s363 = smul.u32 16, %s21
      %p364 = scmp.lt.s32.totalorder %s363, 31
      %s365 = scalar_select %p364, %s363, 31
      %s366 = smul.addr %s365, 8
      %s367 = scalar_lea.vmem %s8, %s366
      %s368 = smul.u32 16, %s21
      %s369 = smul.u32 16, %s21
      %p370 = scmp.lt.s32.totalorder %s369, 31
      %s371 = scalar_select %p370, %s369, 31
      %s372 = smul.addr %s371, 8
      %s373 = scalar_lea.vmem %s9, %s372
      %s374 = smul.u32 16, %s21
      %v376 = vld [vmem:[%s3] sm:$0xff]
      %v377 = vld [vmem:[%s3 + $0x8] sm:$0xff]
      %v378 = vld [vmem:[%s3 + $0x10] sm:$0xff]
      %v379 = vld [vmem:[%s3 + $0x18] sm:$0xff]
      %v380 = vld [vmem:[%s3 + $0x20] sm:$0xff]
      %v381 = vld [vmem:[%s3 + $0x28] sm:$0xff]
      %v382 = vld [vmem:[%s3 + $0x30] sm:$0xff]
      %v383 = vld [vmem:[%s3 + $0x38] sm:$0xff]
      %v384 = vld [vmem:[%s3 + $0x40] sm:$0xff]
      %v385 = vld [vmem:[%s3 + $0x48] sm:$0xff]
      %v386 = vld [vmem:[%s3 + $0x50] sm:$0xff]
      %v387 = vld [vmem:[%s3 + $0x58] sm:$0xff]
      %v388 = vld [vmem:[%s3 + $0x60] sm:$0xff]
      %v389 = vld [vmem:[%s3 + $0x68] sm:$0xff]
      %v390 = vld [vmem:[%s3 + $0x70] sm:$0xff]
      %v391 = vld [vmem:[%s3 + $0x78] sm:$0xff]
      %v392 = vld [vmem:[%s3 + $0x80] sm:$0xff]
      %v393 = vld [vmem:[%s3 + $0x88] sm:$0xff]
      %v394 = vld [vmem:[%s3 + $0x90] sm:$0xff]
      %v395 = vld [vmem:[%s3 + $0x98] sm:$0xff]
      %v396 = vld [vmem:[%s3 + $0xa0] sm:$0xff]
      %v397 = vld [vmem:[%s3 + $0xa8] sm:$0xff]
      %v398 = vld [vmem:[%s3 + $0xb0] sm:$0xff]
      %v399 = vld [vmem:[%s3 + $0xb8] sm:$0xff]
      %v400 = vld [vmem:[%s3 + $0xc0] sm:$0xff]
      %v401 = vld [vmem:[%s3 + $0xc8] sm:$0xff]
      %v402 = vld [vmem:[%s3 + $0xd0] sm:$0xff]
      %v403 = vld [vmem:[%s3 + $0xd8] sm:$0xff]
      %v404 = vld [vmem:[%s3 + $0xe0] sm:$0xff]
      %v405 = vld [vmem:[%s3 + $0xe8] sm:$0xff]
      %v406 = vld [vmem:[%s3 + $0xf0] sm:$0xff]
      %v407 = vld [vmem:[%s3 + $0xf8] sm:$0xff]
      %v408 = vld [vmem:[%s2] sm:$0xff]
      %v409 = vld [vmem:[%s2 + $0x8] sm:$0xff]
      %v410 = vld [vmem:[%s2 + $0x10] sm:$0xff]
      %v411 = vld [vmem:[%s2 + $0x18] sm:$0xff]
      %v412 = vld [vmem:[%s2 + $0x20] sm:$0xff]
      %v413 = vld [vmem:[%s2 + $0x28] sm:$0xff]
      %v414 = vld [vmem:[%s2 + $0x30] sm:$0xff]
      %v415 = vld [vmem:[%s2 + $0x38] sm:$0xff]
      %v416 = vld [vmem:[%s2 + $0x40] sm:$0xff]
      %v417 = vld [vmem:[%s2 + $0x48] sm:$0xff]
      %v418 = vld [vmem:[%s2 + $0x50] sm:$0xff]
      %v419 = vld [vmem:[%s2 + $0x58] sm:$0xff]
      %v420 = vld [vmem:[%s2 + $0x60] sm:$0xff]
      %v421 = vld [vmem:[%s2 + $0x68] sm:$0xff]
      %v422 = vld [vmem:[%s2 + $0x70] sm:$0xff]
      %v423 = vld [vmem:[%s2 + $0x78] sm:$0xff]
      %v424 = vld [vmem:[%s2 + $0x80] sm:$0xff]
      %v425 = vld [vmem:[%s2 + $0x88] sm:$0xff]
      %v426 = vld [vmem:[%s2 + $0x90] sm:$0xff]
      %v427 = vld [vmem:[%s2 + $0x98] sm:$0xff]
      %v428 = vld [vmem:[%s2 + $0xa0] sm:$0xff]
      %v429 = vld [vmem:[%s2 + $0xa8] sm:$0xff]
      %v430 = vld [vmem:[%s2 + $0xb0] sm:$0xff]
      %v431 = vld [vmem:[%s2 + $0xb8] sm:$0xff]
      %v432 = vld [vmem:[%s2 + $0xc0] sm:$0xff]
      %v433 = vld [vmem:[%s2 + $0xc8] sm:$0xff]
      %v434 = vld [vmem:[%s2 + $0xd0] sm:$0xff]
      %v435 = vld [vmem:[%s2 + $0xd8] sm:$0xff]
      %v436 = vld [vmem:[%s2 + $0xe0] sm:$0xff]
      %v437 = vld [vmem:[%s2 + $0xe8] sm:$0xff]
      %v438 = vld [vmem:[%s2 + $0xf0] sm:$0xff]
      %v439 = vld [vmem:[%s2 + $0xf8] sm:$0xff]
      %441 = vset.pattern.permute.xlu0 0
      %442 = vperm.xlu0 %441, %v408
      %v443 = vpop.permute.xlu0 %442
      %446 = vset.pattern.permute.xlu0 0
      %447 = vperm.xlu0 %446, %v409
      %v448 = vpop.permute.xlu0 %447
      %451 = vset.pattern.permute.xlu0 0
      %452 = vperm.xlu0 %451, %v410
      %v453 = vpop.permute.xlu0 %452
      %456 = vset.pattern.permute.xlu0 0
      %457 = vperm.xlu0 %456, %v411
      %v458 = vpop.permute.xlu0 %457
      %461 = vset.pattern.permute.xlu0 0
      %462 = vperm.xlu0 %461, %v412
      %v463 = vpop.permute.xlu0 %462
      %466 = vset.pattern.permute.xlu0 0
      %467 = vperm.xlu0 %466, %v413
      %v468 = vpop.permute.xlu0 %467
      %471 = vset.pattern.permute.xlu0 0
      %472 = vperm.xlu0 %471, %v414
      %v473 = vpop.permute.xlu0 %472
      %476 = vset.pattern.permute.xlu0 0
      %477 = vperm.xlu0 %476, %v415
      %v478 = vpop.permute.xlu0 %477
      %481 = vset.pattern.permute.xlu0 0
      %482 = vperm.xlu0 %481, %v416
      %v483 = vpop.permute.xlu0 %482
      %486 = vset.pattern.permute.xlu0 0
      %487 = vperm.xlu0 %486, %v417
      %v488 = vpop.permute.xlu0 %487
      %491 = vset.pattern.permute.xlu0 0
      %492 = vperm.xlu0 %491, %v418
      %v493 = vpop.permute.xlu0 %492
      %496 = vset.pattern.permute.xlu0 0
      %497 = vperm.xlu0 %496, %v419
      %v498 = vpop.permute.xlu0 %497
      %501 = vset.pattern.permute.xlu0 0
      %502 = vperm.xlu0 %501, %v420
      %v503 = vpop.permute.xlu0 %502
      %506 = vset.pattern.permute.xlu0 0
      %507 = vperm.xlu0 %506, %v421
      %v508 = vpop.permute.xlu0 %507
      %511 = vset.pattern.permute.xlu0 0
      %512 = vperm.xlu0 %511, %v422
      %v513 = vpop.permute.xlu0 %512
      %516 = vset.pattern.permute.xlu0 0
      %517 = vperm.xlu0 %516, %v423
      %v518 = vpop.permute.xlu0 %517
      %521 = vset.pattern.permute.xlu0 0
      %522 = vperm.xlu0 %521, %v424
      %v523 = vpop.permute.xlu0 %522
      %526 = vset.pattern.permute.xlu0 0
      %527 = vperm.xlu0 %526, %v425
      %v528 = vpop.permute.xlu0 %527
      %531 = vset.pattern.permute.xlu0 0
      %532 = vperm.xlu0 %531, %v426
      %v533 = vpop.permute.xlu0 %532
      %536 = vset.pattern.permute.xlu0 0
      %537 = vperm.xlu0 %536, %v427
      %v538 = vpop.permute.xlu0 %537
      %541 = vset.pattern.permute.xlu0 0
      %542 = vperm.xlu0 %541, %v428
      %v543 = vpop.permute.xlu0 %542
      %546 = vset.pattern.permute.xlu0 0
      %547 = vperm.xlu0 %546, %v429
      %v548 = vpop.permute.xlu0 %547
      %551 = vset.pattern.permute.xlu0 0
      %552 = vperm.xlu0 %551, %v430
      %v553 = vpop.permute.xlu0 %552
      %556 = vset.pattern.permute.xlu0 0
      %557 = vperm.xlu0 %556, %v431
      %v558 = vpop.permute.xlu0 %557
      %561 = vset.pattern.permute.xlu0 0
      %562 = vperm.xlu0 %561, %v432
      %v563 = vpop.permute.xlu0 %562
      %566 = vset.pattern.permute.xlu0 0
      %567 = vperm.xlu0 %566, %v433
      %v568 = vpop.permute.xlu0 %567
      %571 = vset.pattern.permute.xlu0 0
      %572 = vperm.xlu0 %571, %v434
      %v573 = vpop.permute.xlu0 %572
      %576 = vset.pattern.permute.xlu0 0
      %577 = vperm.xlu0 %576, %v435
      %v578 = vpop.permute.xlu0 %577
      %581 = vset.pattern.permute.xlu0 0
      %582 = vperm.xlu0 %581, %v436
      %v583 = vpop.permute.xlu0 %582
      %586 = vset.pattern.permute.xlu0 0
      %587 = vperm.xlu0 %586, %v437
      %v588 = vpop.permute.xlu0 %587
      %591 = vset.pattern.permute.xlu0 0
      %592 = vperm.xlu0 %591, %v438
      %v593 = vpop.permute.xlu0 %592
      %596 = vset.pattern.permute.xlu0 0
      %597 = vperm.xlu0 %596, %v439
      %v598 = vpop.permute.xlu0 %597
      %v600 = vmul.f32 %v376, %v443
      %v601 = vmul.f32 %v377, %v448
      %v602 = vmul.f32 %v378, %v453
      %v603 = vmul.f32 %v379, %v458
      %v604 = vmul.f32 %v380, %v463
      %v605 = vmul.f32 %v381, %v468
      %v606 = vmul.f32 %v382, %v473
      %v607 = vmul.f32 %v383, %v478
      %v608 = vmul.f32 %v384, %v483
      %v609 = vmul.f32 %v385, %v488
      %v610 = vmul.f32 %v386, %v493
      %v611 = vmul.f32 %v387, %v498
      %v612 = vmul.f32 %v388, %v503
      %v613 = vmul.f32 %v389, %v508
      %v614 = vmul.f32 %v390, %v513
      %v615 = vmul.f32 %v391, %v518
      %v616 = vmul.f32 %v392, %v523
      %v617 = vmul.f32 %v393, %v528
      %v618 = vmul.f32 %v394, %v533
      %v619 = vmul.f32 %v395, %v538
      %v620 = vmul.f32 %v396, %v543
      %v621 = vmul.f32 %v397, %v548
      %v622 = vmul.f32 %v398, %v553
      %v623 = vmul.f32 %v399, %v558
      %v624 = vmul.f32 %v400, %v563
      %v625 = vmul.f32 %v401, %v568
      %v626 = vmul.f32 %v402, %v573
      %v627 = vmul.f32 %v403, %v578
      %v628 = vmul.f32 %v404, %v583
      %v629 = vmul.f32 %v405, %v588
      %v630 = vmul.f32 %v406, %v593
      %v631 = vmul.f32 %v407, %v598
      %v632 = vld [vmem:[%s355] sm:$0xff]
      %v633 = vld [vmem:[%s355 + $0x8] sm:$0xff]
      %v634 = vld [vmem:[%s355 + $0x10] sm:$0xff]
      %v635 = vld [vmem:[%s355 + $0x18] sm:$0xff]
      %v636 = vld [vmem:[%s355 + $0x20] sm:$0xff]
      %v637 = vld [vmem:[%s355 + $0x28] sm:$0xff]
      %v638 = vld [vmem:[%s355 + $0x30] sm:$0xff]
      %v639 = vld [vmem:[%s355 + $0x38] sm:$0xff]
      %v640 = vld [vmem:[%s355 + $0x40] sm:$0xff]
      %v641 = vld [vmem:[%s355 + $0x48] sm:$0xff]
      %v642 = vld [vmem:[%s355 + $0x50] sm:$0xff]
      %v643 = vld [vmem:[%s355 + $0x58] sm:$0xff]
      %v644 = vld [vmem:[%s355 + $0x60] sm:$0xff]
      %v645 = vld [vmem:[%s355 + $0x68] sm:$0xff]
      %v646 = vld [vmem:[%s355 + $0x70] sm:$0xff]
      %v647 = vld [vmem:[%s355 + $0x78] sm:$0xff]
      %v648 = vld [vmem:[%s4] sm:$0xff]
      %v649 = vld [vmem:[%s4 + $0x8] sm:$0xff]
      %v650 = vld [vmem:[%s4 + $0x10] sm:$0xff]
      %v651 = vld [vmem:[%s4 + $0x18] sm:$0xff]
      %v652 = vld [vmem:[%s4 + $0x20] sm:$0xff]
      %v653 = vld [vmem:[%s4 + $0x28] sm:$0xff]
      %v654 = vld [vmem:[%s4 + $0x30] sm:$0xff]
      %v655 = vld [vmem:[%s4 + $0x38] sm:$0xff]
      %v656 = vld [vmem:[%s4 + $0x40] sm:$0xff]
      %v657 = vld [vmem:[%s4 + $0x48] sm:$0xff]
      %v658 = vld [vmem:[%s4 + $0x50] sm:$0xff]
      %v659 = vld [vmem:[%s4 + $0x58] sm:$0xff]
      %v660 = vld [vmem:[%s4 + $0x60] sm:$0xff]
      %v661 = vld [vmem:[%s4 + $0x68] sm:$0xff]
      %v662 = vld [vmem:[%s4 + $0x70] sm:$0xff]
      %v663 = vld [vmem:[%s4 + $0x78] sm:$0xff]
      %664 = vmatprep.subr.mxu0 0.0
      %665 = vmatpush1.msra.mxu0 %v663
      %666 = vmatprep.subr.mxu0 0.0
      %667 = vmatpush1.msra.mxu0 %v662
      %668 = vmatprep.subr.mxu0 0.0
      %669 = vmatpush1.msra.mxu0 %v661
      %670 = vmatprep.subr.mxu0 0.0
      %671 = vmatpush1.msra.mxu0 %v660
      %672 = vmatprep.subr.mxu0 0.0
      %673 = vmatpush1.msra.mxu0 %v659
      %674 = vmatprep.subr.mxu0 0.0
      %675 = vmatpush1.msra.mxu0 %v658
      %676 = vmatprep.subr.mxu0 0.0
      %677 = vmatpush1.msra.mxu0 %v657
      %678 = vmatprep.subr.mxu0 0.0
      %679 = vmatpush1.msra.mxu0 %v656
      %680 = vmatprep.subr.mxu0 0.0
      %681 = vmatpush1.msra.mxu0 %v655
      %682 = vmatprep.subr.mxu0 0.0
      %683 = vmatpush1.msra.mxu0 %v654
      %684 = vmatprep.subr.mxu0 0.0
      %685 = vmatpush1.msra.mxu0 %v653
      %686 = vmatprep.subr.mxu0 0.0
      %687 = vmatpush1.msra.mxu0 %v652
      %688 = vmatprep.subr.mxu0 0.0
      %689 = vmatpush1.msra.mxu0 %v651
      %690 = vmatprep.subr.mxu0 0.0
      %691 = vmatpush1.msra.mxu0 %v650
      %692 = vmatprep.subr.mxu0 0.0
      %693 = vmatpush1.msra.mxu0 %v649
      %694 = vmatprep.subr.mxu0 0.0
      %695 = vmatpush1.msra.mxu0 %v648
      %696 = vmatprep.subr.mxu0 0.0
      %697 = vmatpush2.msra.mxu0 0.0
      %698 = vmatprep.subr.mxu0 0.0
      %699 = vmatpush2.msra.mxu0 0.0
      %700 = vmatprep.subr.mxu0 0.0
      %701 = vmatpush2.msra.mxu0 0.0
      %702 = vmatprep.subr.mxu0 0.0
      %703 = vmatpush2.msra.mxu0 0.0
      %704 = vmatprep.subr.mxu0 0.0
      %705 = vmatpush2.msra.mxu0 0.0
      %706 = vmatprep.subr.mxu0 0.0
      %707 = vmatpush2.msra.mxu0 0.0
      %708 = vmatprep.subr.mxu0 0.0
      %709 = vmatpush2.msra.mxu0 0.0
      %710 = vmatprep.subr.mxu0 0.0
      %711 = vmatpush2.msra.mxu0 0.0
      %712 = vmatprep.subr.mxu0 0.0
      %713 = vmatpush2.msra.mxu0 0.0
      %714 = vmatprep.subr.mxu0 0.0
      %715 = vmatpush2.msra.mxu0 0.0
      %716 = vmatprep.subr.mxu0 0.0
      %717 = vmatpush2.msra.mxu0 0.0
      %718 = vmatprep.subr.mxu0 0.0
      %719 = vmatpush2.msra.mxu0 0.0
      %720 = vmatprep.subr.mxu0 0.0
      %721 = vmatpush2.msra.mxu0 0.0
      %722 = vmatprep.subr.mxu0 0.0
      %723 = vmatpush2.msra.mxu0 0.0
      %724 = vmatprep.subr.mxu0 0.0
      %725 = vmatpush2.msra.mxu0 0.0
      %726 = vmatprep.subr.mxu0 0.0
      %727 = vmatpush2.msra.mxu0 0.0
      %728 = vmatprep.mubr.f32.mxu0 0.0
      %729 = vmatmul.mubr.f32.gmra.mxu0 %v600
      %v730 = vpop.f32.mrf.mxu0
      %v731 = vadd.f32 0.0, %v730
      %v732 = vpop.f32.mrf.mxu0
      %733 = vmatprep.mubr.f32.mxu0 0.0
      %734 = vmatmul.mubr.f32.gmra.mxu0 %v601
      %v735 = vpop.f32.mrf.mxu0
      %v736 = vadd.f32 0.0, %v735
      %v737 = vpop.f32.mrf.mxu0
      %738 = vmatprep.mubr.f32.mxu0 0.0
      %739 = vmatmul.mubr.f32.gmra.mxu0 %v602
      %v740 = vpop.f32.mrf.mxu0
      %v741 = vadd.f32 0.0, %v740
      %v742 = vpop.f32.mrf.mxu0
      %743 = vmatprep.mubr.f32.mxu0 0.0
      %744 = vmatmul.mubr.f32.gmra.mxu0 %v603
      %v745 = vpop.f32.mrf.mxu0
      %v746 = vadd.f32 0.0, %v745
      %v747 = vpop.f32.mrf.mxu0
      %748 = vmatprep.mubr.f32.mxu0 0.0
      %749 = vmatmul.mubr.f32.gmra.mxu0 %v604
      %v750 = vpop.f32.mrf.mxu0
      %v751 = vadd.f32 0.0, %v750
      %v752 = vpop.f32.mrf.mxu0
      %753 = vmatprep.mubr.f32.mxu0 0.0
      %754 = vmatmul.mubr.f32.gmra.mxu0 %v605
      %v755 = vpop.f32.mrf.mxu0
      %v756 = vadd.f32 0.0, %v755
      %v757 = vpop.f32.mrf.mxu0
      %758 = vmatprep.mubr.f32.mxu0 0.0
      %759 = vmatmul.mubr.f32.gmra.mxu0 %v606
      %v760 = vpop.f32.mrf.mxu0
      %v761 = vadd.f32 0.0, %v760
      %v762 = vpop.f32.mrf.mxu0
      %763 = vmatprep.mubr.f32.mxu0 0.0
      %764 = vmatmul.mubr.f32.gmra.mxu0 %v607
      %v765 = vpop.f32.mrf.mxu0
      %v766 = vadd.f32 0.0, %v765
      %v767 = vpop.f32.mrf.mxu0
      %768 = vmatprep.mubr.f32.mxu0 0.0
      %769 = vmatmul.mubr.f32.gmra.mxu0 %v608
      %v770 = vpop.f32.mrf.mxu0
      %v771 = vadd.f32 0.0, %v770
      %v772 = vpop.f32.mrf.mxu0
      %773 = vmatprep.mubr.f32.mxu0 0.0
      %774 = vmatmul.mubr.f32.gmra.mxu0 %v609
      %v775 = vpop.f32.mrf.mxu0
      %v776 = vadd.f32 0.0, %v775
      %v777 = vpop.f32.mrf.mxu0
      %778 = vmatprep.mubr.f32.mxu0 0.0
      %779 = vmatmul.mubr.f32.gmra.mxu0 %v610
      %v780 = vpop.f32.mrf.mxu0
      %v781 = vadd.f32 0.0, %v780
      %v782 = vpop.f32.mrf.mxu0
      %783 = vmatprep.mubr.f32.mxu0 0.0
      %784 = vmatmul.mubr.f32.gmra.mxu0 %v611
      %v785 = vpop.f32.mrf.mxu0
      %v786 = vadd.f32 0.0, %v785
      %v787 = vpop.f32.mrf.mxu0
      %788 = vmatprep.mubr.f32.mxu0 0.0
      %789 = vmatmul.mubr.f32.gmra.mxu0 %v612
      %v790 = vpop.f32.mrf.mxu0
      %v791 = vadd.f32 0.0, %v790
      %v792 = vpop.f32.mrf.mxu0
      %793 = vmatprep.mubr.f32.mxu0 0.0
      %794 = vmatmul.mubr.f32.gmra.mxu0 %v613
      %v795 = vpop.f32.mrf.mxu0
      %v796 = vadd.f32 0.0, %v795
      %v797 = vpop.f32.mrf.mxu0
      %798 = vmatprep.mubr.f32.mxu0 0.0
      %799 = vmatmul.mubr.f32.gmra.mxu0 %v614
      %v800 = vpop.f32.mrf.mxu0
      %v801 = vadd.f32 0.0, %v800
      %v802 = vpop.f32.mrf.mxu0
      %803 = vmatprep.mubr.f32.mxu0 0.0
      %804 = vmatmul.mubr.f32.gmra.mxu0 %v615
      %v805 = vpop.f32.mrf.mxu0
      %v806 = vadd.f32 0.0, %v805
      %v807 = vpop.f32.mrf.mxu0
      %808 = vmatprep.mubr.f32.mxu0 0.0
      %809 = vmatmul.mubr.f32.gmra.mxu0 %v616
      %v810 = vpop.f32.mrf.mxu0
      %v811 = vadd.f32 0.0, %v810
      %v812 = vpop.f32.mrf.mxu0
      %813 = vmatprep.mubr.f32.mxu0 0.0
      %814 = vmatmul.mubr.f32.gmra.mxu0 %v617
      %v815 = vpop.f32.mrf.mxu0
      %v816 = vadd.f32 0.0, %v815
      %v817 = vpop.f32.mrf.mxu0
      %818 = vmatprep.mubr.f32.mxu0 0.0
      %819 = vmatmul.mubr.f32.gmra.mxu0 %v618
      %v820 = vpop.f32.mrf.mxu0
      %v821 = vadd.f32 0.0, %v820
      %v822 = vpop.f32.mrf.mxu0
      %823 = vmatprep.mubr.f32.mxu0 0.0
      %824 = vmatmul.mubr.f32.gmra.mxu0 %v619
      %v825 = vpop.f32.mrf.mxu0
      %v826 = vadd.f32 0.0, %v825
      %v827 = vpop.f32.mrf.mxu0
      %828 = vmatprep.mubr.f32.mxu0 0.0
      %829 = vmatmul.mubr.f32.gmra.mxu0 %v620
      %v830 = vpop.f32.mrf.mxu0
      %v831 = vadd.f32 0.0, %v830
      %v832 = vpop.f32.mrf.mxu0
      %833 = vmatprep.mubr.f32.mxu0 0.0
      %834 = vmatmul.mubr.f32.gmra.mxu0 %v621
      %v835 = vpop.f32.mrf.mxu0
      %v836 = vadd.f32 0.0, %v835
      %v837 = vpop.f32.mrf.mxu0
      %838 = vmatprep.mubr.f32.mxu0 0.0
      %839 = vmatmul.mubr.f32.gmra.mxu0 %v622
      %v840 = vpop.f32.mrf.mxu0
      %v841 = vadd.f32 0.0, %v840
      %v842 = vpop.f32.mrf.mxu0
      %843 = vmatprep.mubr.f32.mxu0 0.0
      %844 = vmatmul.mubr.f32.gmra.mxu0 %v623
      %v845 = vpop.f32.mrf.mxu0
      %v846 = vadd.f32 0.0, %v845
      %v847 = vpop.f32.mrf.mxu0
      %848 = vmatprep.mubr.f32.mxu0 0.0
      %849 = vmatmul.mubr.f32.gmra.mxu0 %v624
      %v850 = vpop.f32.mrf.mxu0
      %v851 = vadd.f32 0.0, %v850
      %v852 = vpop.f32.mrf.mxu0
      %853 = vmatprep.mubr.f32.mxu0 0.0
      %854 = vmatmul.mubr.f32.gmra.mxu0 %v625
      %v855 = vpop.f32.mrf.mxu0
      %v856 = vadd.f32 0.0, %v855
      %v857 = vpop.f32.mrf.mxu0
      %858 = vmatprep.mubr.f32.mxu0 0.0
      %859 = vmatmul.mubr.f32.gmra.mxu0 %v626
      %v860 = vpop.f32.mrf.mxu0
      %v861 = vadd.f32 0.0, %v860
      %v862 = vpop.f32.mrf.mxu0
      %863 = vmatprep.mubr.f32.mxu0 0.0
      %864 = vmatmul.mubr.f32.gmra.mxu0 %v627
      %v865 = vpop.f32.mrf.mxu0
      %v866 = vadd.f32 0.0, %v865
      %v867 = vpop.f32.mrf.mxu0
      %868 = vmatprep.mubr.f32.mxu0 0.0
      %869 = vmatmul.mubr.f32.gmra.mxu0 %v628
      %v870 = vpop.f32.mrf.mxu0
      %v871 = vadd.f32 0.0, %v870
      %v872 = vpop.f32.mrf.mxu0
      %873 = vmatprep.mubr.f32.mxu0 0.0
      %874 = vmatmul.mubr.f32.gmra.mxu0 %v629
      %v875 = vpop.f32.mrf.mxu0
      %v876 = vadd.f32 0.0, %v875
      %v877 = vpop.f32.mrf.mxu0
      %878 = vmatprep.mubr.f32.mxu0 0.0
      %879 = vmatmul.mubr.f32.gmra.mxu0 %v630
      %v880 = vpop.f32.mrf.mxu0
      %v881 = vadd.f32 0.0, %v880
      %v882 = vpop.f32.mrf.mxu0
      %883 = vmatprep.mubr.f32.mxu0 0.0
      %884 = vmatmul.mubr.f32.gmra.mxu0 %v631
      %v885 = vpop.f32.mrf.mxu0
      %v886 = vadd.f32 0.0, %v885
      %v887 = vpop.f32.mrf.mxu0
      %888 = vdwg.mxu0
      %v889 = vpack.c.bf16 %v736, %v731
      %v890 = vpack.c.bf16 %v746, %v741
      %v891 = vpack.c.bf16 %v756, %v751
      %v892 = vpack.c.bf16 %v766, %v761
      %v893 = vpack.c.bf16 %v776, %v771
      %v894 = vpack.c.bf16 %v786, %v781
      %v895 = vpack.c.bf16 %v796, %v791
      %v896 = vpack.c.bf16 %v806, %v801
      %v897 = vpack.c.bf16 %v816, %v811
      %v898 = vpack.c.bf16 %v826, %v821
      %v899 = vpack.c.bf16 %v836, %v831
      %v900 = vpack.c.bf16 %v846, %v841
      %v901 = vpack.c.bf16 %v856, %v851
      %v902 = vpack.c.bf16 %v866, %v861
      %v903 = vpack.c.bf16 %v876, %v871
      %v904 = vpack.c.bf16 %v886, %v881
      %v921 = vunpack.c.l.b16 %v632
      %v922 = vunpack.c.h.b16 %v632
      %v923 = vunpack.c.l.b16 %v633
      %v924 = vunpack.c.h.b16 %v633
      %v925 = vunpack.c.l.b16 %v634
      %v926 = vunpack.c.h.b16 %v634
      %v927 = vunpack.c.l.b16 %v635
      %v928 = vunpack.c.h.b16 %v635
      %v929 = vunpack.c.l.b16 %v636
      %v930 = vunpack.c.h.b16 %v636
      %v931 = vunpack.c.l.b16 %v637
      %v932 = vunpack.c.h.b16 %v637
      %v933 = vunpack.c.l.b16 %v638
      %v934 = vunpack.c.h.b16 %v638
      %v935 = vunpack.c.l.b16 %v639
      %v936 = vunpack.c.h.b16 %v639
      %v937 = vunpack.c.l.b16 %v640
      %v938 = vunpack.c.h.b16 %v640
      %v939 = vunpack.c.l.b16 %v641
      %v940 = vunpack.c.h.b16 %v641
      %v941 = vunpack.c.l.b16 %v642
      %v942 = vunpack.c.h.b16 %v642
      %v943 = vunpack.c.l.b16 %v643
      %v944 = vunpack.c.h.b16 %v643
      %v945 = vunpack.c.l.b16 %v644
      %v946 = vunpack.c.h.b16 %v644
      %v947 = vunpack.c.l.b16 %v645
      %v948 = vunpack.c.h.b16 %v645
      %v949 = vunpack.c.l.b16 %v646
      %v950 = vunpack.c.h.b16 %v646
      %v951 = vunpack.c.l.b16 %v647
      %v952 = vunpack.c.h.b16 %v647
      %v953 = vpack.c.b16 %v923, %v921
      %v954 = vpack.c.b16 %v924, %v922
      %v955 = vpack.c.b16 %v927, %v925
      %v956 = vpack.c.b16 %v928, %v926
      %v957 = vpack.c.b16 %v931, %v929
      %v958 = vpack.c.b16 %v932, %v930
      %v959 = vpack.c.b16 %v935, %v933
      %v960 = vpack.c.b16 %v936, %v934
      %v961 = vpack.c.b16 %v939, %v937
      %v962 = vpack.c.b16 %v940, %v938
      %v963 = vpack.c.b16 %v943, %v941
      %v964 = vpack.c.b16 %v944, %v942
      %v965 = vpack.c.b16 %v947, %v945
      %v966 = vpack.c.b16 %v948, %v946
      %v967 = vpack.c.b16 %v951, %v949
      %v968 = vpack.c.b16 %v952, %v950
      %985 = vmatprep.subr.bf16.mxu0 0
      %986 = vmatpush1.bf16.msra.mxu0 %v896
      %987 = vmatprep.subr.bf16.mxu0 0
      %988 = vmatpush1.bf16.msra.mxu0 %v895
      %989 = vmatprep.subr.bf16.mxu0 0
      %990 = vmatpush1.bf16.msra.mxu0 %v894
      %991 = vmatprep.subr.bf16.mxu0 0
      %992 = vmatpush1.bf16.msra.mxu0 %v893
      %993 = vmatprep.subr.bf16.mxu0 0
      %994 = vmatpush1.bf16.msra.mxu0 %v892
      %995 = vmatprep.subr.bf16.mxu0 0
      %996 = vmatpush1.bf16.msra.mxu0 %v891
      %997 = vmatprep.subr.bf16.mxu0 0
      %998 = vmatpush1.bf16.msra.mxu0 %v890
      %999 = vmatprep.subr.bf16.mxu0 0
      %1000 = vmatpush1.bf16.msra.mxu0 %v889
      %1001 = vmatprep.subr.bf16.mxu0 0
      %1002 = vmatpush2.bf16.msra.mxu0 %v904
      %1003 = vmatprep.subr.bf16.mxu0 0
      %1004 = vmatpush2.bf16.msra.mxu0 %v903
      %1005 = vmatprep.subr.bf16.mxu0 0
      %1006 = vmatpush2.bf16.msra.mxu0 %v902
      %1007 = vmatprep.subr.bf16.mxu0 0
      %1008 = vmatpush2.bf16.msra.mxu0 %v901
      %1009 = vmatprep.subr.bf16.mxu0 0
      %1010 = vmatpush2.bf16.msra.mxu0 %v900
      %1011 = vmatprep.subr.bf16.mxu0 0
      %1012 = vmatpush2.bf16.msra.mxu0 %v899
      %1013 = vmatprep.subr.bf16.mxu0 0
      %1014 = vmatpush2.bf16.msra.mxu0 %v898
      %1015 = vmatprep.subr.bf16.mxu0 0
      %1016 = vmatpush2.bf16.msra.mxu0 %v897
      %1017 = vmatprep.mubr.bf16.mxu0 %v954
      %1018 = vmatmul.mubr.bf16.gmra.mxu0 %v953
      %v1019 = vpop.f32.mrf.mxu0
      %v1020 = vadd.f32 0.0, %v1019
      %v1021 = vpop.f32.mrf.mxu0
      %v1022 = vpop.f32.mrf.mxu0
      %v1023 = vadd.f32 0.0, %v1022
      %v1024 = vpop.f32.mrf.mxu0
      %1025 = vmatprep.mubr.bf16.mxu0 %v956
      %1026 = vmatmul.mubr.bf16.gmra.mxu0 %v955
      %v1027 = vpop.f32.mrf.mxu0
      %v1028 = vadd.f32 0.0, %v1027
      %v1029 = vpop.f32.mrf.mxu0
      %v1030 = vpop.f32.mrf.mxu0
      %v1031 = vadd.f32 0.0, %v1030
      %v1032 = vpop.f32.mrf.mxu0
      %1033 = vmatprep.mubr.bf16.mxu0 %v958
      %1034 = vmatmul.mubr.bf16.gmra.mxu0 %v957
      %v1035 = vpop.f32.mrf.mxu0
      %v1036 = vadd.f32 0.0, %v1035
      %v1037 = vpop.f32.mrf.mxu0
      %v1038 = vpop.f32.mrf.mxu0
      %v1039 = vadd.f32 0.0, %v1038
      %v1040 = vpop.f32.mrf.mxu0
      %1041 = vmatprep.mubr.bf16.mxu0 %v960
      %1042 = vmatmul.mubr.bf16.gmra.mxu0 %v959
      %v1043 = vpop.f32.mrf.mxu0
      %v1044 = vadd.f32 0.0, %v1043
      %v1045 = vpop.f32.mrf.mxu0
      %v1046 = vpop.f32.mrf.mxu0
      %v1047 = vadd.f32 0.0, %v1046
      %v1048 = vpop.f32.mrf.mxu0
      %1049 = vmatprep.mubr.bf16.mxu0 %v962
      %1050 = vmatmul.mubr.bf16.gmra.mxu0 %v961
      %v1051 = vpop.f32.mrf.mxu0
      %v1052 = vadd.f32 0.0, %v1051
      %v1053 = vpop.f32.mrf.mxu0
      %v1054 = vpop.f32.mrf.mxu0
      %v1055 = vadd.f32 0.0, %v1054
      %v1056 = vpop.f32.mrf.mxu0
      %1057 = vmatprep.mubr.bf16.mxu0 %v964
      %1058 = vmatmul.mubr.bf16.gmra.mxu0 %v963
      %v1059 = vpop.f32.mrf.mxu0
      %v1060 = vadd.f32 0.0, %v1059
      %v1061 = vpop.f32.mrf.mxu0
      %v1062 = vpop.f32.mrf.mxu0
      %v1063 = vadd.f32 0.0, %v1062
      %v1064 = vpop.f32.mrf.mxu0
      %1065 = vmatprep.mubr.bf16.mxu0 %v966
      %1066 = vmatmul.mubr.bf16.gmra.mxu0 %v965
      %v1067 = vpop.f32.mrf.mxu0
      %v1068 = vadd.f32 0.0, %v1067
      %v1069 = vpop.f32.mrf.mxu0
      %v1070 = vpop.f32.mrf.mxu0
      %v1071 = vadd.f32 0.0, %v1070
      %v1072 = vpop.f32.mrf.mxu0
      %1073 = vmatprep.mubr.bf16.mxu0 %v968
      %1074 = vmatmul.mubr.bf16.gmra.mxu0 %v967
      %v1075 = vpop.f32.mrf.mxu0
      %v1076 = vadd.f32 0.0, %v1075
      %v1077 = vpop.f32.mrf.mxu0
      %v1078 = vpop.f32.mrf.mxu0
      %v1079 = vadd.f32 0.0, %v1078
      %v1080 = vpop.f32.mrf.mxu0
      %1081 = vdwg.mxu0
      %v1082 = vld [vmem:[%s361] sm:$0xff]
      %v1083 = vld [vmem:[%s361 + $0x8] sm:$0xff]
      %v1084 = vld [vmem:[%s361 + $0x10] sm:$0xff]
      %v1085 = vld [vmem:[%s361 + $0x18] sm:$0xff]
      %v1086 = vld [vmem:[%s361 + $0x20] sm:$0xff]
      %v1087 = vld [vmem:[%s361 + $0x28] sm:$0xff]
      %v1088 = vld [vmem:[%s361 + $0x30] sm:$0xff]
      %v1089 = vld [vmem:[%s361 + $0x38] sm:$0xff]
      %v1090 = vld [vmem:[%s361 + $0x40] sm:$0xff]
      %v1091 = vld [vmem:[%s361 + $0x48] sm:$0xff]
      %v1092 = vld [vmem:[%s361 + $0x50] sm:$0xff]
      %v1093 = vld [vmem:[%s361 + $0x58] sm:$0xff]
      %v1094 = vld [vmem:[%s361 + $0x60] sm:$0xff]
      %v1095 = vld [vmem:[%s361 + $0x68] sm:$0xff]
      %v1096 = vld [vmem:[%s361 + $0x70] sm:$0xff]
      %v1097 = vld [vmem:[%s361 + $0x78] sm:$0xff]
      %1099 = vset.pattern.permute.xlu0 0
      %1100 = vperm.xlu0 %1099, %v1082
      %v1101 = vpop.permute.xlu0 %1100
      %1104 = vset.pattern.permute.xlu0 0
      %1105 = vperm.xlu0 %1104, %v1083
      %v1106 = vpop.permute.xlu0 %1105
      %1109 = vset.pattern.permute.xlu0 0
      %1110 = vperm.xlu0 %1109, %v1084
      %v1111 = vpop.permute.xlu0 %1110
      %1114 = vset.pattern.permute.xlu0 0
      %1115 = vperm.xlu0 %1114, %v1085
      %v1116 = vpop.permute.xlu0 %1115
      %1119 = vset.pattern.permute.xlu0 0
      %1120 = vperm.xlu0 %1119, %v1086
      %v1121 = vpop.permute.xlu0 %1120
      %1124 = vset.pattern.permute.xlu0 0
      %1125 = vperm.xlu0 %1124, %v1087
      %v1126 = vpop.permute.xlu0 %1125
      %1129 = vset.pattern.permute.xlu0 0
      %1130 = vperm.xlu0 %1129, %v1088
      %v1131 = vpop.permute.xlu0 %1130
      %1134 = vset.pattern.permute.xlu0 0
      %1135 = vperm.xlu0 %1134, %v1089
      %v1136 = vpop.permute.xlu0 %1135
      %1139 = vset.pattern.permute.xlu0 0
      %1140 = vperm.xlu0 %1139, %v1090
      %v1141 = vpop.permute.xlu0 %1140
      %1144 = vset.pattern.permute.xlu0 0
      %1145 = vperm.xlu0 %1144, %v1091
      %v1146 = vpop.permute.xlu0 %1145
      %1149 = vset.pattern.permute.xlu0 0
      %1150 = vperm.xlu0 %1149, %v1092
      %v1151 = vpop.permute.xlu0 %1150
      %1154 = vset.pattern.permute.xlu0 0
      %1155 = vperm.xlu0 %1154, %v1093
      %v1156 = vpop.permute.xlu0 %1155
      %1159 = vset.pattern.permute.xlu0 0
      %1160 = vperm.xlu0 %1159, %v1094
      %v1161 = vpop.permute.xlu0 %1160
      %1164 = vset.pattern.permute.xlu0 0
      %1165 = vperm.xlu0 %1164, %v1095
      %v1166 = vpop.permute.xlu0 %1165
      %1169 = vset.pattern.permute.xlu0 0
      %1170 = vperm.xlu0 %1169, %v1096
      %v1171 = vpop.permute.xlu0 %1170
      %1174 = vset.pattern.permute.xlu0 0
      %1175 = vperm.xlu0 %1174, %v1097
      %v1176 = vpop.permute.xlu0 %1175
      %v1178 = vmul.f32 %v1020, %v1101
      %v1179 = vmul.f32 %v1023, %v1106
      %v1180 = vmul.f32 %v1028, %v1111
      %v1181 = vmul.f32 %v1031, %v1116
      %v1182 = vmul.f32 %v1036, %v1121
      %v1183 = vmul.f32 %v1039, %v1126
      %v1184 = vmul.f32 %v1044, %v1131
      %v1185 = vmul.f32 %v1047, %v1136
      %v1186 = vmul.f32 %v1052, %v1141
      %v1187 = vmul.f32 %v1055, %v1146
      %v1188 = vmul.f32 %v1060, %v1151
      %v1189 = vmul.f32 %v1063, %v1156
      %v1190 = vmul.f32 %v1068, %v1161
      %v1191 = vmul.f32 %v1071, %v1166
      %v1192 = vmul.f32 %v1076, %v1171
      %v1193 = vmul.f32 %v1079, %v1176
      %v1194 = vld [vmem:[%s5] sm:$0x1]
      %v1196 = vlaneseq
      %v1197 = vshrl.u32 %v1196, 7
      %v1198 = vsub.s32 0, %v1197
      %v1199 = vrot.slane %v1194, %v1198
      %v1201 = vadd.f32 %v1178, %v1199
      %v1202 = vadd.f32 %v1179, %v1199
      %v1203 = vadd.f32 %v1180, %v1199
      %v1204 = vadd.f32 %v1181, %v1199
      %v1205 = vadd.f32 %v1182, %v1199
      %v1206 = vadd.f32 %v1183, %v1199
      %v1207 = vadd.f32 %v1184, %v1199
      %v1208 = vadd.f32 %v1185, %v1199
      %v1209 = vadd.f32 %v1186, %v1199
      %v1210 = vadd.f32 %v1187, %v1199
      %v1211 = vadd.f32 %v1188, %v1199
      %v1212 = vadd.f32 %v1189, %v1199
      %v1213 = vadd.f32 %v1190, %v1199
      %v1214 = vadd.f32 %v1191, %v1199
      %v1215 = vadd.f32 %v1192, %v1199
      %v1216 = vadd.f32 %v1193, %v1199
      %v1217 = vmax.f32 %v1201, 0.0
      %v1218 = vmax.f32 %v1202, 0.0
      %v1219 = vmax.f32 %v1203, 0.0
      %v1220 = vmax.f32 %v1204, 0.0
      %v1221 = vmax.f32 %v1205, 0.0
      %v1222 = vmax.f32 %v1206, 0.0
      %v1223 = vmax.f32 %v1207, 0.0
      %v1224 = vmax.f32 %v1208, 0.0
      %v1225 = vmax.f32 %v1209, 0.0
      %v1226 = vmax.f32 %v1210, 0.0
      %v1227 = vmax.f32 %v1211, 0.0
      %v1228 = vmax.f32 %v1212, 0.0
      %v1229 = vmax.f32 %v1213, 0.0
      %v1230 = vmax.f32 %v1214, 0.0
      %v1231 = vmax.f32 %v1215, 0.0
      %v1232 = vmax.f32 %v1216, 0.0
      %vm1233 = vcmask 261120
      %1234 = vst.msk [vmem:[%s367] sm:$0xff] %vm1233, %v1217
      %1235 = vst.msk [vmem:[%s367 + $0x8] sm:$0xff] %vm1233, %v1218
      %1236 = vst.msk [vmem:[%s367 + $0x10] sm:$0xff] %vm1233, %v1219
      %1237 = vst.msk [vmem:[%s367 + $0x18] sm:$0xff] %vm1233, %v1220
      %1238 = vst.msk [vmem:[%s367 + $0x20] sm:$0xff] %vm1233, %v1221
      %1239 = vst.msk [vmem:[%s367 + $0x28] sm:$0xff] %vm1233, %v1222
      %1240 = vst.msk [vmem:[%s367 + $0x30] sm:$0xff] %vm1233, %v1223
      %1241 = vst.msk [vmem:[%s367 + $0x38] sm:$0xff] %vm1233, %v1224
      %1242 = vst.msk [vmem:[%s367 + $0x40] sm:$0xff] %vm1233, %v1225
      %1243 = vst.msk [vmem:[%s367 + $0x48] sm:$0xff] %vm1233, %v1226
      %1244 = vst.msk [vmem:[%s367 + $0x50] sm:$0xff] %vm1233, %v1227
      %1245 = vst.msk [vmem:[%s367 + $0x58] sm:$0xff] %vm1233, %v1228
      %1246 = vst.msk [vmem:[%s367 + $0x60] sm:$0xff] %vm1233, %v1229
      %1247 = vst.msk [vmem:[%s367 + $0x68] sm:$0xff] %vm1233, %v1230
      %1248 = vst.msk [vmem:[%s367 + $0x70] sm:$0xff] %vm1233, %v1231
      %1249 = vst.msk [vmem:[%s367 + $0x78] sm:$0xff] %vm1233, %v1232
      %v1250 = vld [vmem:[%s6] sm:$0xff]
      %v1251 = vld [vmem:[%s6 + $0x8] sm:$0xff]
      %v1252 = vld [vmem:[%s6 + $0x10] sm:$0xff]
      %v1253 = vld [vmem:[%s6 + $0x18] sm:$0xff]
      %v1254 = vld [vmem:[%s7] sm:$0x1]
      %v1256 = vlaneseq
      %v1257 = vshrl.u32 %v1256, 7
      %v1258 = vsub.s32 0, %v1257
      %v1259 = vrot.slane %v1254, %v1258
      %v1262 = vsel %vm1233, %v1217, 0
      %v1265 = vsel %vm1233, %v1218, 0
      %v1268 = vsel %vm1233, %v1219, 0
      %v1271 = vsel %vm1233, %v1220, 0
      %v1274 = vsel %vm1233, %v1221, 0
      %v1277 = vsel %vm1233, %v1222, 0
      %v1280 = vsel %vm1233, %v1223, 0
      %v1283 = vsel %vm1233, %v1224, 0
      %v1286 = vsel %vm1233, %v1225, 0
      %v1289 = vsel %vm1233, %v1226, 0
      %v1292 = vsel %vm1233, %v1227, 0
      %v1295 = vsel %vm1233, %v1228, 0
      %v1298 = vsel %vm1233, %v1229, 0
      %v1301 = vsel %vm1233, %v1230, 0
      %v1304 = vsel %vm1233, %v1231, 0
      %v1307 = vsel %vm1233, %v1232, 0
      %1309 = vmatprep.subr.mxu0 0.0
      %1310 = vmatpush1.msra.mxu0 0.0
      %1311 = vmatprep.subr.mxu0 0.0
      %1312 = vmatpush1.msra.mxu0 0.0
      %1313 = vmatprep.subr.mxu0 0.0
      %1314 = vmatpush1.msra.mxu0 0.0
      %1315 = vmatprep.subr.mxu0 0.0
      %1316 = vmatpush1.msra.mxu0 0.0
      %1317 = vmatprep.subr.mxu0 0.0
      %1318 = vmatpush1.msra.mxu0 0.0
      %1319 = vmatprep.subr.mxu0 0.0
      %1320 = vmatpush1.msra.mxu0 0.0
      %1321 = vmatprep.subr.mxu0 0.0
      %1322 = vmatpush1.msra.mxu0 0.0
      %1323 = vmatprep.subr.mxu0 0.0
      %1324 = vmatpush1.msra.mxu0 0.0
      %1325 = vmatprep.subr.mxu0 0.0
      %1326 = vmatpush1.msra.mxu0 0.0
      %1327 = vmatprep.subr.mxu0 0.0
      %1328 = vmatpush1.msra.mxu0 0.0
      %1329 = vmatprep.subr.mxu0 0.0
      %1330 = vmatpush1.msra.mxu0 0.0
      %1331 = vmatprep.subr.mxu0 0.0
      %1332 = vmatpush1.msra.mxu0 0.0
      %1333 = vmatprep.subr.mxu0 0.0
      %1334 = vmatpush1.msra.mxu0 %v1253
      %1335 = vmatprep.subr.mxu0 0.0
      %1336 = vmatpush1.msra.mxu0 %v1252
      %1337 = vmatprep.subr.mxu0 0.0
      %1338 = vmatpush1.msra.mxu0 %v1251
      %1339 = vmatprep.subr.mxu0 0.0
      %1340 = vmatpush1.msra.mxu0 %v1250
      %1341 = vmatprep.subr.mxu0 0.0
      %1342 = vmatpush2.msra.mxu0 0.0
      %1343 = vmatprep.subr.mxu0 0.0
      %1344 = vmatpush2.msra.mxu0 0.0
      %1345 = vmatprep.subr.mxu0 0.0
      %1346 = vmatpush2.msra.mxu0 0.0
      %1347 = vmatprep.subr.mxu0 0.0
      %1348 = vmatpush2.msra.mxu0 0.0
      %1349 = vmatprep.subr.mxu0 0.0
      %1350 = vmatpush2.msra.mxu0 0.0
      %1351 = vmatprep.subr.mxu0 0.0
      %1352 = vmatpush2.msra.mxu0 0.0
      %1353 = vmatprep.subr.mxu0 0.0
      %1354 = vmatpush2.msra.mxu0 0.0
      %1355 = vmatprep.subr.mxu0 0.0
      %1356 = vmatpush2.msra.mxu0 0.0
      %1357 = vmatprep.subr.mxu0 0.0
      %1358 = vmatpush2.msra.mxu0 0.0
      %1359 = vmatprep.subr.mxu0 0.0
      %1360 = vmatpush2.msra.mxu0 0.0
      %1361 = vmatprep.subr.mxu0 0.0
      %1362 = vmatpush2.msra.mxu0 0.0
      %1363 = vmatprep.subr.mxu0 0.0
      %1364 = vmatpush2.msra.mxu0 0.0
      %1365 = vmatprep.subr.mxu0 0.0
      %1366 = vmatpush2.msra.mxu0 0.0
      %1367 = vmatprep.subr.mxu0 0.0
      %1368 = vmatpush2.msra.mxu0 0.0
      %1369 = vmatprep.subr.mxu0 0.0
      %1370 = vmatpush2.msra.mxu0 0.0
      %1371 = vmatprep.subr.mxu0 0.0
      %1372 = vmatpush2.msra.mxu0 0.0
      %1373 = vmatprep.mubr.f32.mxu0 0.0
      %1374 = vmatmul.mubr.f32.gmra.mxu0 %v1262
      %v1375 = vpop.f32.mrf.mxu0
      %v1376 = vadd.f32 %v1259, %v1375
      %v1377 = vpop.f32.mrf.mxu0
      %1378 = vmatprep.mubr.f32.mxu0 0.0
      %1379 = vmatmul.mubr.f32.gmra.mxu0 %v1265
      %v1380 = vpop.f32.mrf.mxu0
      %v1381 = vadd.f32 %v1259, %v1380
      %v1382 = vpop.f32.mrf.mxu0
      %1383 = vmatprep.mubr.f32.mxu0 0.0
      %1384 = vmatmul.mubr.f32.gmra.mxu0 %v1268
      %v1385 = vpop.f32.mrf.mxu0
      %v1386 = vadd.f32 %v1259, %v1385
      %v1387 = vpop.f32.mrf.mxu0
      %1388 = vmatprep.mubr.f32.mxu0 0.0
      %1389 = vmatmul.mubr.f32.gmra.mxu0 %v1271
      %v1390 = vpop.f32.mrf.mxu0
      %v1391 = vadd.f32 %v1259, %v1390
      %v1392 = vpop.f32.mrf.mxu0
      %1393 = vmatprep.mubr.f32.mxu0 0.0
      %1394 = vmatmul.mubr.f32.gmra.mxu0 %v1274
      %v1395 = vpop.f32.mrf.mxu0
      %v1396 = vadd.f32 %v1259, %v1395
      %v1397 = vpop.f32.mrf.mxu0
      %1398 = vmatprep.mubr.f32.mxu0 0.0
      %1399 = vmatmul.mubr.f32.gmra.mxu0 %v1277
      %v1400 = vpop.f32.mrf.mxu0
      %v1401 = vadd.f32 %v1259, %v1400
      %v1402 = vpop.f32.mrf.mxu0
      %1403 = vmatprep.mubr.f32.mxu0 0.0
      %1404 = vmatmul.mubr.f32.gmra.mxu0 %v1280
      %v1405 = vpop.f32.mrf.mxu0
      %v1406 = vadd.f32 %v1259, %v1405
      %v1407 = vpop.f32.mrf.mxu0
      %1408 = vmatprep.mubr.f32.mxu0 0.0
      %1409 = vmatmul.mubr.f32.gmra.mxu0 %v1283
      %v1410 = vpop.f32.mrf.mxu0
      %v1411 = vadd.f32 %v1259, %v1410
      %v1412 = vpop.f32.mrf.mxu0
      %1413 = vmatprep.mubr.f32.mxu0 0.0
      %1414 = vmatmul.mubr.f32.gmra.mxu0 %v1286
      %v1415 = vpop.f32.mrf.mxu0
      %v1416 = vadd.f32 %v1259, %v1415
      %v1417 = vpop.f32.mrf.mxu0
      %1418 = vmatprep.mubr.f32.mxu0 0.0
      %1419 = vmatmul.mubr.f32.gmra.mxu0 %v1289
      %v1420 = vpop.f32.mrf.mxu0
      %v1421 = vadd.f32 %v1259, %v1420
      %v1422 = vpop.f32.mrf.mxu0
      %1423 = vmatprep.mubr.f32.mxu0 0.0
      %1424 = vmatmul.mubr.f32.gmra.mxu0 %v1292
      %v1425 = vpop.f32.mrf.mxu0
      %v1426 = vadd.f32 %v1259, %v1425
      %v1427 = vpop.f32.mrf.mxu0
      %1428 = vmatprep.mubr.f32.mxu0 0.0
      %1429 = vmatmul.mubr.f32.gmra.mxu0 %v1295
      %v1430 = vpop.f32.mrf.mxu0
      %v1431 = vadd.f32 %v1259, %v1430
      %v1432 = vpop.f32.mrf.mxu0
      %1433 = vmatprep.mubr.f32.mxu0 0.0
      %1434 = vmatmul.mubr.f32.gmra.mxu0 %v1298
      %v1435 = vpop.f32.mrf.mxu0
      %v1436 = vadd.f32 %v1259, %v1435
      %v1437 = vpop.f32.mrf.mxu0
      %1438 = vmatprep.mubr.f32.mxu0 0.0
      %1439 = vmatmul.mubr.f32.gmra.mxu0 %v1301
      %v1440 = vpop.f32.mrf.mxu0
      %v1441 = vadd.f32 %v1259, %v1440
      %v1442 = vpop.f32.mrf.mxu0
      %1443 = vmatprep.mubr.f32.mxu0 0.0
      %1444 = vmatmul.mubr.f32.gmra.mxu0 %v1304
      %v1445 = vpop.f32.mrf.mxu0
      %v1446 = vadd.f32 %v1259, %v1445
      %v1447 = vpop.f32.mrf.mxu0
      %1448 = vmatprep.mubr.f32.mxu0 0.0
      %1449 = vmatmul.mubr.f32.gmra.mxu0 %v1307
      %v1450 = vpop.f32.mrf.mxu0
      %v1451 = vadd.f32 %v1259, %v1450
      %v1452 = vpop.f32.mrf.mxu0
      %1453 = vdwg.mxu0
      %1454 = vst [vmem:[%s373] sm:$0xff] %v1376
      %1455 = vst [vmem:[%s373 + $0x8] sm:$0xff] %v1381
      %1456 = vst [vmem:[%s373 + $0x10] sm:$0xff] %v1386
      %1457 = vst [vmem:[%s373 + $0x18] sm:$0xff] %v1391
      %1458 = vst [vmem:[%s373 + $0x20] sm:$0xff] %v1396
      %1459 = vst [vmem:[%s373 + $0x28] sm:$0xff] %v1401
      %1460 = vst [vmem:[%s373 + $0x30] sm:$0xff] %v1406
      %1461 = vst [vmem:[%s373 + $0x38] sm:$0xff] %v1411
      %1462 = vst [vmem:[%s373 + $0x40] sm:$0xff] %v1416
      %1463 = vst [vmem:[%s373 + $0x48] sm:$0xff] %v1421
      %1464 = vst [vmem:[%s373 + $0x50] sm:$0xff] %v1426
      %1465 = vst [vmem:[%s373 + $0x58] sm:$0xff] %v1431
      %1466 = vst [vmem:[%s373 + $0x60] sm:$0xff] %v1436
      %1467 = vst [vmem:[%s373 + $0x68] sm:$0xff] %v1441
      %1468 = vst [vmem:[%s373 + $0x70] sm:$0xff] %v1446
      %1469 = vst [vmem:[%s373 + $0x78] sm:$0xff] %v1451
      %s1470 = smul.u32 16, %s21
      %p1471 = scmp.lt.s32.totalorder %s1470, 31
      %s1472 = scalar_select %p1471, %s1470, 31
      %s1473 = smul.addr %s1472, 8
      %s1474 = scalar_lea.vmem %s8, %s1473
      %s1475 = smul.u32 16, %s21
      %p1476 = scmp.lt.s32.totalorder %s1475, 31
      %s1477 = scalar_select %p1476, %s1475, 31
      %s1478 = smul.addr %s1477, 8
      %s1479 = scalar_lea.vmem %s9, %s1478
      // Predicated region
      $region53: #{gcn_extract_forward.3} parent=51 // pred_check
        %p1480 = pneg %p217
      $region54: #{gcn_extract_forward.3} parent=51 // pred_check_branch
        %1482 = sbr.rel (%p1480) target = $region56
      $region55: #{gcn_extract_forward.3} parent=51 // pred_region
        %s1483 = smul.u32 16, %s21
      $region56: #{gcn_extract_forward.3} parent=51 // pred_fallthru
        _
      // Predicated region
      $region57: #{gcn_extract_forward.3} parent=51 // pred_check
        %p1484 = pneg %p243
      $region58: #{gcn_extract_forward.3} parent=51 // pred_check_branch
        %1486 = sbr.rel (%p1484) target = $region60
      $region59: #{gcn_extract_forward.3} parent=51 // pred_region
        %s1487 = smul.u32 16, %s21
      $region60: #{gcn_extract_forward.3} parent=51 // pred_fallthru
        _
    $region52: #{gcn_extract_forward.3} parent=5 // pred_fallthru
      _
    %p1488 = scmp.le.s32.totalorder 2, %s16
    // Predicated region
    $region61: #{gcn_extract_forward.3} parent=5 // pred_check
      %p1489 = pneg %p1488
    $region62: #{gcn_extract_forward.3} parent=5 // pred_check_branch
      %1491 = sbr.rel (%p1489) target = $region64
    $region63: #{gcn_extract_forward.3} parent=5 // pred_region
      %s1492 = ssub.s32 %s16, 2
      // Predicated region
      $region65: #{gcn_extract_forward.3} parent=63 // pred_check
        %p1493 = pneg %p223
      $region66: #{gcn_extract_forward.3} parent=63 // pred_check_branch
        %1495 = sbr.rel (%p1493) target = $region68
      $region67: #{gcn_extract_forward.3} parent=63 // pred_region
        %s1496 = smul.u32 16, %s22
        %p1497 = scmp.lt.s32.totalorder %s1496, 31
        %s1498 = scalar_select %p1497, %s1496, 31
        %s1499 = smul.addr %s1498, 8
        %s1500 = scalar_lea.vmem %s8, %s1499
      $region68: #{gcn_extract_forward.3} parent=63 // pred_fallthru
        _
      // Predicated region
      $region69: #{gcn_extract_forward.3} parent=63 // pred_check
        %p1501 = pneg %p249
      $region70: #{gcn_extract_forward.3} parent=63 // pred_check_branch
        %1503 = sbr.rel (%p1501) target = $region72
      $region71: #{gcn_extract_forward.3} parent=63 // pred_region
        %s1504 = smul.u32 16, %s22
        %p1505 = scmp.lt.s32.totalorder %s1504, 31
        %s1506 = scalar_select %p1505, %s1504, 31
        %s1507 = smul.addr %s1506, 8
        %s1508 = scalar_lea.vmem %s9, %s1507
      $region72: #{gcn_extract_forward.3} parent=63 // pred_fallthru
        _
    $region64: #{gcn_extract_forward.3} parent=5 // pred_fallthru
      _
  $region6: #{gcn_extract_forward.3} parent=0 // loop_footer
    %s20 = sadd.s32 1, %s16
  $region7: #{gcn_extract_forward.3} parent=0 // loop_footer_branch
    %15 = sbr.rel target = $region3
  $region8: #{gcn_extract_forward.3} parent=0 // loop_exit
    _

</llo_original>
